<compile_context>
chip_gen: v7x
topology: tpu7x:2x2x1
jax: 0.10.0
libtpu: 0.0.40
codegen_flags: <defaults>
</compile_context>

<pallas_src>
import functools

import jax
import jax.numpy as jnp
from jax import lax
from jax.experimental import pallas as pl
from jax.experimental.pallas import tpu as pltpu


# ----------------------------------------------------------------------------
# In-kernel helpers
# ----------------------------------------------------------------------------
def _fill_padded(src_ref, pad_ref):
    """Zero-pad src (1,H,W,C) by one pixel into the VMEM scratch pad_ref (1,H+2,W+2,C)."""
    H, W = src_ref.shape[1], src_ref.shape[2]
    pad_ref[...] = jnp.zeros(pad_ref.shape, jnp.float32)
    pad_ref[:, 1:H + 1, 1:W + 1, :] = src_ref[...]


def _dw_conv3x3(pad_ref, w9, Ho, Wo, stride):
    """3x3 depthwise conv read from the padded VMEM scratch; returns (1,Ho,Wo,C) f32."""
    C = w9.shape[-1]
    acc = jnp.zeros((1, Ho, Wo, C), jnp.float32)
    for kh in range(3):
        for kw in range(3):
            if stride == 1:
                tap = pad_ref[:, kh:kh + Ho, kw:kw + Wo, :]
            else:
                # In-kernel stride: read only the strided output taps (no wasted MACs / writes).
                tap = pad_ref[:, pl.ds(kh, Ho, stride=stride),
                              pl.ds(kw, Wo, stride=stride), :]
            acc = acc + tap * w9[kh * 3 + kw]          # broadcast over channel (lane) dim
    return acc


def _pw_conv(x, w, shift):
    """1x1 conv as an unrolled VPU broadcast-MAC (Cin small).  x:(1,Ho,Wo,Cin) w:(Cin,Cout) shift:(1,Cout)."""
    Cin, Cout = w.shape
    y = jnp.zeros(x.shape[:3] + (Cout,), jnp.float32)
    for ci in range(Cin):
        y = y + x[..., ci:ci + 1] * w[ci].reshape(1, 1, 1, Cout)
    return y + shift.reshape(1, 1, 1, Cout)


# ----------------------------------------------------------------------------
# Fused kernels
# ----------------------------------------------------------------------------
def _dw_pw_kernel(x_ref, dw_ref, pw_ref, shift_ref, o_ref, pad_ref, *, stride, relu):
    # dw3x3 (stride) -> 1x1 conv (BN-scaled weights) -> +shift (-> ReLU)
    Ho, Wo = o_ref.shape[1], o_ref.shape[2]
    _fill_padded(x_ref, pad_ref)
    h = _dw_conv3x3(pad_ref, dw_ref[...], Ho, Wo, stride)
    y = _pw_conv(h, pw_ref[...], shift_ref[...])
    if relu:
        y = jnp.maximum(y, 0.0)
    o_ref[...] = y


def _dw_pw_addres_kernel(x_ref, dw_ref, pw_ref, shift_ref, res_ref, o_ref, pad_ref):
    # dw3x3 -> 1x1 conv + BN -> + identity residual -> ReLU
    Ho, Wo = o_ref.shape[1], o_ref.shape[2]
    _fill_padded(x_ref, pad_ref)
    h = _dw_conv3x3(pad_ref, dw_ref[...], Ho, Wo, 1)
    y = _pw_conv(h, pw_ref[...], shift_ref[...])
    o_ref[...] = jnp.maximum(y + res_ref[...], 0.0)


def _dw_pw_convres_kernel(x_ref, dw_ref, pw_ref, shift_ref,
                          r_ref, scw_ref, scshift_ref, o_ref, pad_ref, *, sc_stride):
    # dw3x3 -> 1x1 conv + BN -> + (1x1-conv-stride-s + BN shortcut, computed in-kernel) -> ReLU
    Ho, Wo = o_ref.shape[1], o_ref.shape[2]
    _fill_padded(x_ref, pad_ref)
    h = _dw_conv3x3(pad_ref, dw_ref[...], Ho, Wo, 1)
    y = _pw_conv(h, pw_ref[...], shift_ref[...])
    if sc_stride == 1:
        r = r_ref[...]
    else:
        r = r_ref[:, pl.ds(0, Ho, stride=sc_stride), pl.ds(0, Wo, stride=sc_stride), :]
    sc = _pw_conv(r, scw_ref[...], scshift_ref[...])
    o_ref[...] = jnp.maximum(y + sc, 0.0)


# ----------------------------------------------------------------------------
# pallas_call wrappers
# ----------------------------------------------------------------------------
def _cparams():
    # Explicit VMEM budget (portable to v7x's 64 MiB / TC) + batch axis shared across TCs.
    return pltpu.CompilerParams(dimension_semantics=("parallel",),
                                vmem_limit_bytes=32 * 1024 * 1024)


def fused_dw_pw(x, dw_w, pw_w, shift, *, stride, relu):
    """Fused depthwise 3x3 (stride, pad=1) + pointwise (BN-folded) (+ReLU).  x: (N,H,W,Cin) NHWC."""
    N, H, W, Cin = x.shape
    Cout = pw_w.shape[1]
    Ho = (H - 1) // stride + 1
    Wo = (W - 1) // stride + 1
    return pl.pallas_call(
        functools.partial(_dw_pw_kernel, stride=stride, relu=relu),
        out_shape=jax.ShapeDtypeStruct((N, Ho, Wo, Cout), jnp.float32),
        grid=(N,),
        in_specs=[
            pl.BlockSpec((1, H, W, Cin), lambda b: (b, 0, 0, 0)),
            pl.BlockSpec((9, Cin), lambda b: (0, 0)),
            pl.BlockSpec((Cin, Cout), lambda b: (0, 0)),
            pl.BlockSpec((1, Cout), lambda b: (0, 0)),
        ],
        out_specs=pl.BlockSpec((1, Ho, Wo, Cout), lambda b: (b, 0, 0, 0)),
        scratch_shapes=[pltpu.VMEM((1, H + 2, W + 2, Cin), jnp.float32)],
        compiler_params=_cparams(),
    )(x, dw_w.reshape(9, Cin), pw_w, shift.reshape(1, Cout))


def fused_dw_pw_addres(x, dw_w, pw_w, shift, res):
    """Fused dw3x3 + pointwise + BN + identity residual + ReLU."""
    N, H, W, Cin = x.shape
    Cout = pw_w.shape[1]
    return pl.pallas_call(
        _dw_pw_addres_kernel,
        out_shape=jax.ShapeDtypeStruct((N, H, W, Cout), jnp.float32),
        grid=(N,),
        in_specs=[
            pl.BlockSpec((1, H, W, Cin), lambda b: (b, 0, 0, 0)),
            pl.BlockSpec((9, Cin), lambda b: (0, 0)),
            pl.BlockSpec((Cin, Cout), lambda b: (0, 0)),
            pl.BlockSpec((1, Cout), lambda b: (0, 0)),
            pl.BlockSpec((1, H, W, Cout), lambda b: (b, 0, 0, 0)),
        ],
        out_specs=pl.BlockSpec((1, H, W, Cout), lambda b: (b, 0, 0, 0)),
        scratch_shapes=[pltpu.VMEM((1, H + 2, W + 2, Cin), jnp.float32)],
        compiler_params=_cparams(),
    )(x, dw_w.reshape(9, Cin), pw_w, shift.reshape(1, Cout), res)


def fused_dw_pw_convres(x, dw_w, pw_w, shift, r, scw, scshift, *, sc_stride):
    """Fused dw3x3 + pointwise + BN + (1x1-conv + BN shortcut on r) + ReLU."""
    N, H, W, Cmid = x.shape                 # x is the stage-1 output
    Cout = pw_w.shape[1]
    Hr, Wr, Cr = r.shape[1], r.shape[2], r.shape[3]
    return pl.pallas_call(
        functools.partial(_dw_pw_convres_kernel, sc_stride=sc_stride),
        out_shape=jax.ShapeDtypeStruct((N, H, W, Cout), jnp.float32),
        grid=(N,),
        in_specs=[
            pl.BlockSpec((1, H, W, Cmid), lambda b: (b, 0, 0, 0)),
            pl.BlockSpec((9, Cmid), lambda b: (0, 0)),
            pl.BlockSpec((Cmid, Cout), lambda b: (0, 0)),
            pl.BlockSpec((1, Cout), lambda b: (0, 0)),
            pl.BlockSpec((1, Hr, Wr, Cr), lambda b: (b, 0, 0, 0)),
            pl.BlockSpec((Cr, Cout), lambda b: (0, 0)),
            pl.BlockSpec((1, Cout), lambda b: (0, 0)),
        ],
        out_specs=pl.BlockSpec((1, H, W, Cout), lambda b: (b, 0, 0, 0)),
        scratch_shapes=[pltpu.VMEM((1, H + 2, W + 2, Cmid), jnp.float32)],
        compiler_params=_cparams(),
    )(x, dw_w.reshape(9, Cmid), pw_w, shift.reshape(1, Cout),
      r, scw, scshift.reshape(1, Cout))


def fold_bn(bn, eps=1e-5):
    gamma, beta, mean, var = bn
    scale = gamma / jnp.sqrt(var + eps)
    shift = beta - mean * scale
    return scale, shift


# ----------------------------------------------------------------------------
# BasicBlock forward (Pallas): exactly two fused kernels
# ----------------------------------------------------------------------------
def basic_block_forward(x_nchw, p, stride=1):
    Cin = x_nchw.shape[1]
    Cout = p["pw1"].shape[1]
    # NCHW -> NHWC at the block boundary (a full network would stay NHWC end-to-end).
    x = jnp.transpose(x_nchw, (0, 2, 3, 1)).astype(jnp.float32)

    s1, b1 = fold_bn(p["bn1"])
    s2, b2 = fold_bn(p["bn2"])

    # Stage 1: relu(bn1(pw1(dw1(x)))) -- single kernel, BN scale folded into pw1 weights.
    h = fused_dw_pw(x, p["dw1"], p["pw1"] * s1[None, :], b1, stride=stride, relu=True)

    # Stage 2: relu(bn2(pw2(dw2(h))) + shortcut(x)) -- single kernel, shortcut fused in.
    if stride != 1 or Cin != Cout:
        ss, bs = fold_bn(p["bn_sc"])
        out = fused_dw_pw_convres(h, p["dw2"], p["pw2"] * s2[None, :], b2,
                                  x, p["w_sc"] * ss[None, :], bs, sc_stride=stride)
    else:
        out = fused_dw_pw_addres(h, p["dw2"], p["pw2"] * s2[None, :], b2, x)

    return jnp.transpose(out, (0, 3, 1, 2))     # NHWC -> NCHW


# ----------------------------------------------------------------------------
# Pure-JAX reference (NCHW, mirrors the PyTorch forward) for verification
# ----------------------------------------------------------------------------
def _conv_nchw(x, w, stride=1, padding=0, groups=1):
    return lax.conv_general_dilated(
        x, w, window_strides=(stride, stride),
        padding=[(padding, padding), (padding, padding)],
        dimension_numbers=("NCHW", "OIHW", "NCHW"),
        feature_group_count=groups)


def _bn_nchw(x, bn, eps=1e-5):
    gamma, beta, mean, var = bn
    s = (gamma / jnp.sqrt(var + eps)).reshape(1, -1, 1, 1)
    b = (beta - mean * gamma / jnp.sqrt(var + eps)).reshape(1, -1, 1, 1)
    return x * s + b


def basic_block_reference(x, tp, stride=1):
    Cin, Cout = x.shape[1], tp["pw1"].shape[0]
    h = _conv_nchw(x, tp["dw1"], stride, 1, groups=Cin)
    h = _conv_nchw(h, tp["pw1"])
    h = jnp.maximum(_bn_nchw(h, tp["bn1"]), 0.0)
    h2 = _conv_nchw(h, tp["dw2"], 1, 1, groups=Cout)
    h2 = _bn_nchw(_conv_nchw(h2, tp["pw2"]), tp["bn2"])
    if stride != 1 or Cin != Cout:
        sc = _bn_nchw(_conv_nchw(x, tp["w_sc"], stride), tp["bn_sc"])
    else:
        sc = x
    return jnp.maximum(h2 + sc, 0.0)


# ----------------------------------------------------------------------------
# Deterministic parameter construction
# ----------------------------------------------------------------------------
def make_params(key, cin, cout):
    ks = jax.random.split(key, 12)

    def bn_params(k, c):
        k1, k2, k3, k4 = jax.random.split(k, 4)
        gamma = 1.0 + 0.1 * jax.random.normal(k1, (c,), jnp.float32)
        beta = 0.1 * jax.random.normal(k2, (c,), jnp.float32)
        mean = 0.1 * jax.random.normal(k3, (c,), jnp.float32)
        var = 1.0 + 0.2 * jax.random.uniform(k4, (c,), jnp.float32)
        return (gamma, beta, mean, var)

    # PyTorch-shaped weights
    dw1_t = 0.1 * jax.random.normal(ks[0], (cin, 1, 3, 3), jnp.float32)     # depthwise1
    pw1_t = 0.1 * jax.random.normal(ks[1], (cout, cin, 1, 1), jnp.float32)  # pointwise1
    dw2_t = 0.1 * jax.random.normal(ks[2], (cout, 1, 3, 3), jnp.float32)    # depthwise2
    pw2_t = 0.1 * jax.random.normal(ks[3], (cout, cout, 1, 1), jnp.float32) # pointwise2
    wsc_t = 0.1 * jax.random.normal(ks[4], (cout, cin, 1, 1), jnp.float32)  # shortcut 1x1

    torch_params = {
        "dw1": dw1_t, "pw1": pw1_t, "dw2": dw2_t, "pw2": pw2_t, "w_sc": wsc_t,
        "bn1": bn_params(ks[5], cout),
        "bn2": bn_params(ks[6], cout),
        "bn_sc": bn_params(ks[7], cout),
    }

    # Kernel-layout weights
    pallas_params = {
        "dw1": jnp.transpose(dw1_t[:, 0], (1, 2, 0)),          # (3,3,Cin)
        "pw1": jnp.transpose(pw1_t[:, :, 0, 0], (1, 0)),       # (Cin,Cout)
        "dw2": jnp.transpose(dw2_t[:, 0], (1, 2, 0)),          # (3,3,Cout)
        "pw2": jnp.transpose(pw2_t[:, :, 0, 0], (1, 0)),       # (Cout,Cout)
        "w_sc": jnp.transpose(wsc_t[:, :, 0, 0], (1, 0)),      # (Cin,Cout)
        "bn1": torch_params["bn1"],
        "bn2": torch_params["bn2"],
        "bn_sc": torch_params["bn_sc"],
    }
    return pallas_params, torch_params


# ----------------------------------------------------------------------------
if __name__ == "__main__":
    key = jax.random.PRNGKey(0)
    configs = [
        # (N, Cin, Cout, H, W, stride)
        (2, 4, 8, 16, 16, 1),   # Cin != Cout -> conv shortcut fused into kernel B
        (2, 8, 8, 16, 16, 1),   # identity shortcut path
    ]
    for idx, (N, Cin, Cout, H, W, stride) in enumerate(configs):
        k_x, k_p = jax.random.split(jax.random.fold_in(key, idx))
        x = jax.random.normal(k_x, (N, Cin, H, W), jnp.float32)   # PyTorch-style NCHW input

        pallas_params, torch_params = make_params(k_p, Cin, Cout)

        out = jax.block_until_ready(basic_block_forward(x, pallas_params, stride=stride))
        ref = jax.block_until_ready(basic_block_reference(x, torch_params, stride=stride))

        Ho = (H - 1) // stride + 1
        Wo = (W - 1) // stride + 1
        assert out.shape == (N, Cout, Ho, Wo), out.shape
        max_err = float(jnp.max(jnp.abs(out - ref)))
        assert jnp.allclose(out, ref, atol=1e-4, rtol=1e-4), max_err

    print("KERNEL_OK")
</pallas_src>

<mosaic_0001>
module attributes {stable_mosaic.version = 11 : i64} {
  func.func @_dw_pw_kernel(%arg0: i32, %arg1: memref<1x16x16x4xf32, #tpu.memory_space<vmem>>, %arg2: memref<9x4xf32, #tpu.memory_space<vmem>>, %arg3: memref<4x8xf32, #tpu.memory_space<vmem>>, %arg4: memref<1x8xf32, #tpu.memory_space<vmem>>, %arg5: memref<1x16x16x8xf32, #tpu.memory_space<vmem>>, %arg6: memref<1x18x18x4xf32, #tpu.memory_space<vmem>>) attributes {dimension_semantics = [#tpu.dimension_semantics<parallel>], iteration_bounds = array<i64: 2>, scalar_prefetch = 0 : i64, scratch_operands = 1 : i64, tpu.core_type = #tpu.core_type<tc>, window_params = [{transform_indices = @transform_0, window_bounds = array<i64: 1, 16, 16, 4>}, {pipeline_mode = #tpu.pipeline_mode<synchronous>, transform_indices = @transform_1, window_bounds = array<i64: 9, 4>}, {pipeline_mode = #tpu.pipeline_mode<synchronous>, transform_indices = @transform_2, window_bounds = array<i64: 4, 8>}, {pipeline_mode = #tpu.pipeline_mode<synchronous>, transform_indices = @transform_3, window_bounds = array<i64: 1, 8>}, {transform_indices = @transform_4, window_bounds = array<i64: 1, 16, 16, 8>}]} {
    %cst = arith.constant 0.000000e+00 : f32
    %0 = vector.broadcast %cst : f32 to vector<1x18x18x4xf32>
    %c0 = arith.constant 0 : index
    %c0_0 = arith.constant 0 : index
    %c0_1 = arith.constant 0 : index
    %c0_2 = arith.constant 0 : index
    %1 = vector.load %arg6[%c0, %c0_0, %c0_1, %c0_2] : memref<1x18x18x4xf32, #tpu.memory_space<vmem>>, vector<1x18x18x4xf32>
    tpu.vector_store %arg6[%c0, %c0_0, %c0_1, %c0_2], %0 {strides = array<i32>} : memref<1x18x18x4xf32, #tpu.memory_space<vmem>>, vector<1x18x18x4xf32>,
    %c0_3 = arith.constant 0 : index
    %c0_4 = arith.constant 0 : index
    %c0_5 = arith.constant 0 : index
    %c0_6 = arith.constant 0 : index
    %2 = vector.load %arg1[%c0_3, %c0_4, %c0_5, %c0_6] : memref<1x16x16x4xf32, #tpu.memory_space<vmem>>, vector<1x16x16x4xf32>
    %c0_7 = arith.constant 0 : index
    %c1 = arith.constant 1 : index
    %c1_8 = arith.constant 1 : index
    %c0_9 = arith.constant 0 : index
    %3 = vector.load %arg6[%c0_7, %c1, %c1_8, %c0_9] : memref<1x18x18x4xf32, #tpu.memory_space<vmem>>, vector<1x16x16x4xf32>
    tpu.vector_store %arg6[%c0_7, %c1, %c1_8, %c0_9], %2 {strides = array<i32>} : memref<1x18x18x4xf32, #tpu.memory_space<vmem>>, vector<1x16x16x4xf32>,
    %c0_10 = arith.constant 0 : index
    %c0_11 = arith.constant 0 : index
    %4 = vector.load %arg2[%c0_10, %c0_11] : memref<9x4xf32, #tpu.memory_space<vmem>>, vector<9x4xf32>
    %cst_12 = arith.constant 0.000000e+00 : f32
    %5 = vector.broadcast %cst_12 : f32 to vector<1x16x16x4xf32>
    %c0_13 = arith.constant 0 : index
    %c0_14 = arith.constant 0 : index
    %c0_15 = arith.constant 0 : index
    %c0_16 = arith.constant 0 : index
    %6 = vector.load %arg6[%c0_13, %c0_14, %c0_15, %c0_16] : memref<1x18x18x4xf32, #tpu.memory_space<vmem>>, vector<1x16x16x4xf32>
    %7 = vector.extract_strided_slice %4 {offsets = [0, 0], sizes = [1, 4], strides = [1, 1]} : vector<9x4xf32> to vector<1x4xf32>
    %8 = vector.shape_cast %7 : vector<1x4xf32> to vector<4xf32>
    %9 = vector.shape_cast %8 : vector<4xf32> to vector<1x1x1x4xf32>
    %10 = vector.broadcast %9 : vector<1x1x1x4xf32> to vector<1x16x16x4xf32>
    %11 = arith.mulf %6, %10 : vector<1x16x16x4xf32>
    %12 = arith.addf %5, %11 : vector<1x16x16x4xf32>
    %c0_17 = arith.constant 0 : index
    %c0_18 = arith.constant 0 : index
    %c1_19 = arith.constant 1 : index
    %c0_20 = arith.constant 0 : index
    %13 = vector.load %arg6[%c0_17, %c0_18, %c1_19, %c0_20] : memref<1x18x18x4xf32, #tpu.memory_space<vmem>>, vector<1x16x16x4xf32>
    %14 = vector.extract_strided_slice %4 {offsets = [1, 0], sizes = [1, 4], strides = [1, 1]} : vector<9x4xf32> to vector<1x4xf32>
    %15 = vector.shape_cast %14 : vector<1x4xf32> to vector<4xf32>
    %16 = vector.shape_cast %15 : vector<4xf32> to vector<1x1x1x4xf32>
    %17 = vector.broadcast %16 : vector<1x1x1x4xf32> to vector<1x16x16x4xf32>
    %18 = arith.mulf %13, %17 : vector<1x16x16x4xf32>
    %19 = arith.addf %12, %18 : vector<1x16x16x4xf32>
    %c0_21 = arith.constant 0 : index
    %c0_22 = arith.constant 0 : index
    %c2 = arith.constant 2 : index
    %c0_23 = arith.constant 0 : index
    %20 = vector.load %arg6[%c0_21, %c0_22, %c2, %c0_23] : memref<1x18x18x4xf32, #tpu.memory_space<vmem>>, vector<1x16x16x4xf32>
    %21 = vector.extract_strided_slice %4 {offsets = [2, 0], sizes = [1, 4], strides = [1, 1]} : vector<9x4xf32> to vector<1x4xf32>
    %22 = vector.shape_cast %21 : vector<1x4xf32> to vector<4xf32>
    %23 = vector.shape_cast %22 : vector<4xf32> to vector<1x1x1x4xf32>
    %24 = vector.broadcast %23 : vector<1x1x1x4xf32> to vector<1x16x16x4xf32>
    %25 = arith.mulf %20, %24 : vector<1x16x16x4xf32>
    %26 = arith.addf %19, %25 : vector<1x16x16x4xf32>
    %c0_24 = arith.constant 0 : index
    %c1_25 = arith.constant 1 : index
    %c0_26 = arith.constant 0 : index
    %c0_27 = arith.constant 0 : index
    %27 = vector.load %arg6[%c0_24, %c1_25, %c0_26, %c0_27] : memref<1x18x18x4xf32, #tpu.memory_space<vmem>>, vector<1x16x16x4xf32>
    %28 = vector.extract_strided_slice %4 {offsets = [3, 0], sizes = [1, 4], strides = [1, 1]} : vector<9x4xf32> to vector<1x4xf32>
    %29 = vector.shape_cast %28 : vector<1x4xf32> to vector<4xf32>
    %30 = vector.shape_cast %29 : vector<4xf32> to vector<1x1x1x4xf32>
    %31 = vector.broadcast %30 : vector<1x1x1x4xf32> to vector<1x16x16x4xf32>
    %32 = arith.mulf %27, %31 : vector<1x16x16x4xf32>
    %33 = arith.addf %26, %32 : vector<1x16x16x4xf32>
    %c0_28 = arith.constant 0 : index
    %c1_29 = arith.constant 1 : index
    %c1_30 = arith.constant 1 : index
    %c0_31 = arith.constant 0 : index
    %34 = vector.load %arg6[%c0_28, %c1_29, %c1_30, %c0_31] : memref<1x18x18x4xf32, #tpu.memory_space<vmem>>, vector<1x16x16x4xf32>
    %35 = vector.extract_strided_slice %4 {offsets = [4, 0], sizes = [1, 4], strides = [1, 1]} : vector<9x4xf32> to vector<1x4xf32>
    %36 = vector.shape_cast %35 : vector<1x4xf32> to vector<4xf32>
    %37 = vector.shape_cast %36 : vector<4xf32> to vector<1x1x1x4xf32>
    %38 = vector.broadcast %37 : vector<1x1x1x4xf32> to vector<1x16x16x4xf32>
    %39 = arith.mulf %34, %38 : vector<1x16x16x4xf32>
    %40 = arith.addf %33, %39 : vector<1x16x16x4xf32>
    %c0_32 = arith.constant 0 : index
    %c1_33 = arith.constant 1 : index
    %c2_34 = arith.constant 2 : index
    %c0_35 = arith.constant 0 : index
    %41 = vector.load %arg6[%c0_32, %c1_33, %c2_34, %c0_35] : memref<1x18x18x4xf32, #tpu.memory_space<vmem>>, vector<1x16x16x4xf32>
    %42 = vector.extract_strided_slice %4 {offsets = [5, 0], sizes = [1, 4], strides = [1, 1]} : vector<9x4xf32> to vector<1x4xf32>
    %43 = vector.shape_cast %42 : vector<1x4xf32> to vector<4xf32>
    %44 = vector.shape_cast %43 : vector<4xf32> to vector<1x1x1x4xf32>
    %45 = vector.broadcast %44 : vector<1x1x1x4xf32> to vector<1x16x16x4xf32>
    %46 = arith.mulf %41, %45 : vector<1x16x16x4xf32>
    %47 = arith.addf %40, %46 : vector<1x16x16x4xf32>
    %c0_36 = arith.constant 0 : index
    %c2_37 = arith.constant 2 : index
    %c0_38 = arith.constant 0 : index
    %c0_39 = arith.constant 0 : index
    %48 = vector.load %arg6[%c0_36, %c2_37, %c0_38, %c0_39] : memref<1x18x18x4xf32, #tpu.memory_space<vmem>>, vector<1x16x16x4xf32>
    %49 = vector.extract_strided_slice %4 {offsets = [6, 0], sizes = [1, 4], strides = [1, 1]} : vector<9x4xf32> to vector<1x4xf32>
    %50 = vector.shape_cast %49 : vector<1x4xf32> to vector<4xf32>
    %51 = vector.shape_cast %50 : vector<4xf32> to vector<1x1x1x4xf32>
    %52 = vector.broadcast %51 : vector<1x1x1x4xf32> to vector<1x16x16x4xf32>
    %53 = arith.mulf %48, %52 : vector<1x16x16x4xf32>
    %54 = arith.addf %47, %53 : vector<1x16x16x4xf32>
    %c0_40 = arith.constant 0 : index
    %c2_41 = arith.constant 2 : index
    %c1_42 = arith.constant 1 : index
    %c0_43 = arith.constant 0 : index
    %55 = vector.load %arg6[%c0_40, %c2_41, %c1_42, %c0_43] : memref<1x18x18x4xf32, #tpu.memory_space<vmem>>, vector<1x16x16x4xf32>
    %56 = vector.extract_strided_slice %4 {offsets = [7, 0], sizes = [1, 4], strides = [1, 1]} : vector<9x4xf32> to vector<1x4xf32>
    %57 = vector.shape_cast %56 : vector<1x4xf32> to vector<4xf32>
    %58 = vector.shape_cast %57 : vector<4xf32> to vector<1x1x1x4xf32>
    %59 = vector.broadcast %58 : vector<1x1x1x4xf32> to vector<1x16x16x4xf32>
    %60 = arith.mulf %55, %59 : vector<1x16x16x4xf32>
    %61 = arith.addf %54, %60 : vector<1x16x16x4xf32>
    %c0_44 = arith.constant 0 : index
    %c2_45 = arith.constant 2 : index
    %c2_46 = arith.constant 2 : index
    %c0_47 = arith.constant 0 : index
    %62 = vector.load %arg6[%c0_44, %c2_45, %c2_46, %c0_47] : memref<1x18x18x4xf32, #tpu.memory_space<vmem>>, vector<1x16x16x4xf32>
    %63 = vector.extract_strided_slice %4 {offsets = [8, 0], sizes = [1, 4], strides = [1, 1]} : vector<9x4xf32> to vector<1x4xf32>
    %64 = vector.shape_cast %63 : vector<1x4xf32> to vector<4xf32>
    %65 = vector.shape_cast %64 : vector<4xf32> to vector<1x1x1x4xf32>
    %66 = vector.broadcast %65 : vector<1x1x1x4xf32> to vector<1x16x16x4xf32>
    %67 = arith.mulf %62, %66 : vector<1x16x16x4xf32>
    %68 = arith.addf %61, %67 : vector<1x16x16x4xf32>
    %c0_48 = arith.constant 0 : index
    %c0_49 = arith.constant 0 : index
    %69 = vector.load %arg3[%c0_48, %c0_49] : memref<4x8xf32, #tpu.memory_space<vmem>>, vector<4x8xf32>
    %c0_50 = arith.constant 0 : index
    %c0_51 = arith.constant 0 : index
    %70 = vector.load %arg4[%c0_50, %c0_51] : memref<1x8xf32, #tpu.memory_space<vmem>>, vector<1x8xf32>
    %cst_52 = arith.constant 0.000000e+00 : f32
    %71 = vector.broadcast %cst_52 : f32 to vector<1x16x16x8xf32>
    %72 = vector.extract_strided_slice %68 {offsets = [0, 0, 0, 0], sizes = [1, 16, 16, 1], strides = [1, 1, 1, 1]} : vector<1x16x16x4xf32> to vector<1x16x16x1xf32>
    %73 = vector.extract_strided_slice %69 {offsets = [0, 0], sizes = [1, 8], strides = [1, 1]} : vector<4x8xf32> to vector<1x8xf32>
    %74 = vector.shape_cast %73 : vector<1x8xf32> to vector<8xf32>
    %75 = vector.shape_cast %74 : vector<8xf32> to vector<1x1x1x8xf32>
    %76 = vector.broadcast %72 : vector<1x16x16x1xf32> to vector<1x16x16x8xf32>
    %77 = vector.broadcast %75 : vector<1x1x1x8xf32> to vector<1x16x16x8xf32>
    %78 = arith.mulf %76, %77 : vector<1x16x16x8xf32>
    %79 = arith.addf %71, %78 : vector<1x16x16x8xf32>
    %80 = vector.extract_strided_slice %68 {offsets = [0, 0, 0, 1], sizes = [1, 16, 16, 1], strides = [1, 1, 1, 1]} : vector<1x16x16x4xf32> to vector<1x16x16x1xf32>
    %81 = vector.extract_strided_slice %69 {offsets = [1, 0], sizes = [1, 8], strides = [1, 1]} : vector<4x8xf32> to vector<1x8xf32>
    %82 = vector.shape_cast %81 : vector<1x8xf32> to vector<8xf32>
    %83 = vector.shape_cast %82 : vector<8xf32> to vector<1x1x1x8xf32>
    %84 = vector.broadcast %80 : vector<1x16x16x1xf32> to vector<1x16x16x8xf32>
    %85 = vector.broadcast %83 : vector<1x1x1x8xf32> to vector<1x16x16x8xf32>
    %86 = arith.mulf %84, %85 : vector<1x16x16x8xf32>
    %87 = arith.addf %79, %86 : vector<1x16x16x8xf32>
    %88 = vector.extract_strided_slice %68 {offsets = [0, 0, 0, 2], sizes = [1, 16, 16, 1], strides = [1, 1, 1, 1]} : vector<1x16x16x4xf32> to vector<1x16x16x1xf32>
    %89 = vector.extract_strided_slice %69 {offsets = [2, 0], sizes = [1, 8], strides = [1, 1]} : vector<4x8xf32> to vector<1x8xf32>
    %90 = vector.shape_cast %89 : vector<1x8xf32> to vector<8xf32>
    %91 = vector.shape_cast %90 : vector<8xf32> to vector<1x1x1x8xf32>
    %92 = vector.broadcast %88 : vector<1x16x16x1xf32> to vector<1x16x16x8xf32>
    %93 = vector.broadcast %91 : vector<1x1x1x8xf32> to vector<1x16x16x8xf32>
    %94 = arith.mulf %92, %93 : vector<1x16x16x8xf32>
    %95 = arith.addf %87, %94 : vector<1x16x16x8xf32>
    %96 = vector.extract_strided_slice %68 {offsets = [0, 0, 0, 3], sizes = [1, 16, 16, 1], strides = [1, 1, 1, 1]} : vector<1x16x16x4xf32> to vector<1x16x16x1xf32>
    %97 = vector.extract_strided_slice %69 {offsets = [3, 0], sizes = [1, 8], strides = [1, 1]} : vector<4x8xf32> to vector<1x8xf32>
    %98 = vector.shape_cast %97 : vector<1x8xf32> to vector<8xf32>
    %99 = vector.shape_cast %98 : vector<8xf32> to vector<1x1x1x8xf32>
    %100 = vector.broadcast %96 : vector<1x16x16x1xf32> to vector<1x16x16x8xf32>
    %101 = vector.broadcast %99 : vector<1x1x1x8xf32> to vector<1x16x16x8xf32>
    %102 = arith.mulf %100, %101 : vector<1x16x16x8xf32>
    %103 = arith.addf %95, %102 : vector<1x16x16x8xf32>
    %104 = vector.shape_cast %70 : vector<1x8xf32> to vector<1x1x1x8xf32>
    %105 = vector.broadcast %104 : vector<1x1x1x8xf32> to vector<1x16x16x8xf32>
    %106 = arith.addf %103, %105 : vector<1x16x16x8xf32>
    %cst_53 = arith.constant 0.000000e+00 : f32
    %107 = vector.broadcast %cst_53 : f32 to vector<1x16x16x8xf32>
    %108 = arith.maximumf %106, %107 : vector<1x16x16x8xf32>
    %c0_54 = arith.constant 0 : index
    %c0_55 = arith.constant 0 : index
    %c0_56 = arith.constant 0 : index
    %c0_57 = arith.constant 0 : index
    %109 = vector.load %arg5[%c0_54, %c0_55, %c0_56, %c0_57] : memref<1x16x16x8xf32, #tpu.memory_space<vmem>>, vector<1x16x16x8xf32>
    tpu.vector_store %arg5[%c0_54, %c0_55, %c0_56, %c0_57], %108 {strides = array<i32>} : memref<1x16x16x8xf32, #tpu.memory_space<vmem>>, vector<1x16x16x8xf32>,
    return
  }
  func.func @transform_0(%arg0: i32) -> (i32, i32, i32, i32) {
    %c0_i32 = arith.constant 0 : i32
    %c0_i32_0 = arith.constant 0 : i32
    %c0_i32_1 = arith.constant 0 : i32
    %c0_i32_2 = arith.constant 0 : i32
    return %arg0, %c0_i32, %c0_i32_0, %c0_i32_1 : i32, i32, i32, i32
  }
  func.func @transform_1(%arg0: i32) -> (i32, i32) {
    %c0_i32 = arith.constant 0 : i32
    %c0_i32_0 = arith.constant 0 : i32
    %c0_i32_1 = arith.constant 0 : i32
    return %c0_i32, %c0_i32_0 : i32, i32
  }
  func.func @transform_2(%arg0: i32) -> (i32, i32) {
    %c0_i32 = arith.constant 0 : i32
    %c0_i32_0 = arith.constant 0 : i32
    %c0_i32_1 = arith.constant 0 : i32
    return %c0_i32, %c0_i32_0 : i32, i32
  }
  func.func @transform_3(%arg0: i32) -> (i32, i32) {
    %c0_i32 = arith.constant 0 : i32
    %c0_i32_0 = arith.constant 0 : i32
    %c0_i32_1 = arith.constant 0 : i32
    return %c0_i32, %c0_i32_0 : i32, i32
  }
  func.func @transform_4(%arg0: i32) -> (i32, i32, i32, i32) {
    %c0_i32 = arith.constant 0 : i32
    %c0_i32_0 = arith.constant 0 : i32
    %c0_i32_1 = arith.constant 0 : i32
    %c0_i32_2 = arith.constant 0 : i32
    return %arg0, %c0_i32, %c0_i32_0, %c0_i32_1 : i32, i32, i32, i32
  }
}

</mosaic_0001>

<llo_original>
// kernel: tpu_custom_call.1
$region0: #{tpu_custom_call.1}
  #allocation0 [shape = 'u32[]', space=smem, size = 0x4, offset = 0x4, fixed_abs, tag = 'smem constant byte address 0x4 - core index']
  #allocation1 [shape = 'u32[144,128]{1,0:T(1,128)}', space=vmem, size = 0x12000, scoped, tag = 'internal scratch']
  #allocation2 [shape = 'f32[1,18,18,4]{3,2,1,0:T(8,128)}', space=vmem, size = 0x36000, scoped, tag = 'scratch operand']
  %s0 = inlined_call_operand.vmem [shape: f32[2,16,16,4], index: 0, kind: input, shape index: {}]
  %s1 = inlined_call_operand.vmem [shape: f32[9,4], index: 1, kind: input, shape index: {}]
  %s2 = inlined_call_operand.vmem [shape: f32[4,8], index: 2, kind: input, shape index: {}]
  %s3 = inlined_call_operand.vmem [shape: f32[1,8], index: 3, kind: input, shape index: {}]
  %s4 = inlined_call_operand.vmem [shape: f32[2,16,16,8], index: 4, kind: output, shape index: {}]
  %s5 = sld [smem:[#allocation0]]
  $region49: #{tpu_custom_call.1} parent=0
    _
  %s7 = ssub.s32 1, %s5
  %s8 = scalar_select 0, %s7, %s5
  loop: start=0, step=1, limit=4
  $region2: #{tpu_custom_call.1} parent=0 // loop_pre_header
    _
  $region3: #{tpu_custom_call.1} parent=0 // loop_header
    %s10 = sphi 0, %s14
    %p11 = scmp.ge.s32.totalorder %s10, 4
    %s20 = sphi 0, %s22
    %s23 = sphi 0, %s20
    %s24 = sphi 0, %s23
    %s40 = sphi 0, %s24
    %s44 = sphi 0, %s44
    %s46 = sphi 0, %s44
    %s47 = sphi 0, %s46
    %s61 = sphi 0, %s47
    %s65 = sphi 0, %s65
    %s67 = sphi 0, %s65
    %s68 = sphi 0, %s67
    %s82 = sphi 0, %s68
    %s86 = sphi 0, %s86
    %s88 = sphi 0, %s86
    %s89 = sphi 0, %s88
    %s103 = sphi 0, %s89
    %s109 = sphi 0, %s111
    %s112 = sphi 0, %s109
    %s113 = sphi 0, %s112
    %s129 = sphi 0, %s113
  $region4: #{tpu_custom_call.1} parent=0 // loop_header_branch
    %13 = sbr.rel (%p11) target = $region8
  $region5: #{tpu_custom_call.1} parent=0 // loop_body
    %s15 = ssub.s32 %s10, 1
    %s16 = ssub.s32 %s10, 2
    %s17 = sadd.s32 %s10, 1
    %s18 = ssub.s32 %s10, %s17
    %p19 = scmp.eq.s32.totalorder %s18, 0
    %s21 = sadd.s32 %s20, 1
    %s22 = scalar_select %p19, %s20, %s21
    %p25 = pneg %p19
    %p26 = scmp.eq.s32.totalorder %s10, 1
    %p27 = por %p25, %p26
    %p28 = scmp.ne.s32.totalorder %s20, %s23
    %p29 = scmp.eq.s32.totalorder %s10, 0
    %p30 = por %p28, %p29
    %p31 = scmp.ne.s32.totalorder %s20, %s23
    %p32 = scmp.eq.s32.totalorder %s15, 1
    %p33 = por %p31, %p32
    %p34 = scmp.ne.s32.totalorder %s23, %s24
    %p35 = scmp.eq.s32.totalorder %s15, 0
    %p36 = por %p34, %p35
    %p37 = scmp.ne.s32.totalorder %s23, %s24
    %p38 = scmp.eq.s32.totalorder %s16, 1
    %p39 = por %p37, %p38
    %p41 = scmp.ne.s32.totalorder %s24, %s40
    %p42 = scmp.eq.s32.totalorder %s16, 0
    %p43 = por %p41, %p42
    %s45 = sadd.s32 %s44, 1
    %p48 = scmp.eq.s32.totalorder %s10, 1
    %p49 = scmp.ne.s32.totalorder %s44, %s46
    %p50 = scmp.eq.s32.totalorder %s10, 0
    %p51 = por %p49, %p50
    %p52 = scmp.ne.s32.totalorder %s44, %s46
    %p53 = scmp.eq.s32.totalorder %s15, 1
    %p54 = por %p52, %p53
    %p55 = scmp.ne.s32.totalorder %s46, %s47
    %p56 = scmp.eq.s32.totalorder %s15, 0
    %p57 = por %p55, %p56
    %p58 = scmp.ne.s32.totalorder %s46, %s47
    %p59 = scmp.eq.s32.totalorder %s16, 1
    %p60 = por %p58, %p59
    %p62 = scmp.ne.s32.totalorder %s47, %s61
    %p63 = scmp.eq.s32.totalorder %s16, 0
    %p64 = por %p62, %p63
    %s66 = sadd.s32 %s65, 1
    %p69 = scmp.eq.s32.totalorder %s10, 1
    %p70 = scmp.ne.s32.totalorder %s65, %s67
    %p71 = scmp.eq.s32.totalorder %s10, 0
    %p72 = por %p70, %p71
    %p73 = scmp.ne.s32.totalorder %s65, %s67
    %p74 = scmp.eq.s32.totalorder %s15, 1
    %p75 = por %p73, %p74
    %p76 = scmp.ne.s32.totalorder %s67, %s68
    %p77 = scmp.eq.s32.totalorder %s15, 0
    %p78 = por %p76, %p77
    %p79 = scmp.ne.s32.totalorder %s67, %s68
    %p80 = scmp.eq.s32.totalorder %s16, 1
    %p81 = por %p79, %p80
    %p83 = scmp.ne.s32.totalorder %s68, %s82
    %p84 = scmp.eq.s32.totalorder %s16, 0
    %p85 = por %p83, %p84
    %s87 = sadd.s32 %s86, 1
    %p90 = scmp.eq.s32.totalorder %s10, 1
    %p91 = scmp.ne.s32.totalorder %s86, %s88
    %p92 = scmp.eq.s32.totalorder %s10, 0
    %p93 = por %p91, %p92
    %p94 = scmp.ne.s32.totalorder %s86, %s88
    %p95 = scmp.eq.s32.totalorder %s15, 1
    %p96 = por %p94, %p95
    %p97 = scmp.ne.s32.totalorder %s88, %s89
    %p98 = scmp.eq.s32.totalorder %s15, 0
    %p99 = por %p97, %p98
    %p100 = scmp.ne.s32.totalorder %s88, %s89
    %p101 = scmp.eq.s32.totalorder %s16, 1
    %p102 = por %p100, %p101
    %p104 = scmp.ne.s32.totalorder %s89, %s103
    %p105 = scmp.eq.s32.totalorder %s16, 0
    %p106 = por %p104, %p105
    %s107 = ssub.s32 %s10, %s17
    %p108 = scmp.eq.s32.totalorder %s107, 0
    %s110 = sadd.s32 %s109, 1
    %s111 = scalar_select %p108, %s109, %s110
    %p114 = pneg %p108
    %p115 = scmp.eq.s32.totalorder %s10, 1
    %p116 = por %p114, %p115
    %p117 = scmp.ne.s32.totalorder %s109, %s112
    %p118 = scmp.eq.s32.totalorder %s10, 0
    %p119 = por %p117, %p118
    %p120 = scmp.ne.s32.totalorder %s109, %s112
    %p121 = scmp.eq.s32.totalorder %s15, 1
    %p122 = por %p120, %p121
    %p123 = scmp.ne.s32.totalorder %s112, %s113
    %p124 = scmp.eq.s32.totalorder %s15, 0
    %p125 = por %p123, %p124
    %p126 = scmp.ne.s32.totalorder %s112, %s113
    %p127 = scmp.eq.s32.totalorder %s16, 1
    %p128 = por %p126, %p127
    %p130 = scmp.ne.s32.totalorder %s113, %s129
    %p131 = scmp.eq.s32.totalorder %s16, 0
    %p132 = por %p130, %p131
    %p133 = scmp.le.s32.totalorder 1, %s10
    %p134 = scmp.lt.s32.totalorder %s10, 3
    %p135 = pnand %p133, %p134
    %p136 = pneg %p135
    // Predicated region
    $region9: #{tpu_custom_call.1} parent=5 // pred_check
      _
    $region10: #{tpu_custom_call.1} parent=5 // pred_check_branch
      %138 = sbr.rel (%p135) target = $region12
    $region11: #{tpu_custom_call.1} parent=5 // pred_region
      %s139 = ssub.s32 %s10, 1
      // Predicated region
      $region13: #{tpu_custom_call.1} parent=11 // pred_check
        %p140 = pneg %p57
      $region14: #{tpu_custom_call.1} parent=11 // pred_check_branch
        %142 = sbr.rel (%p140) target = $region16
      $region15: #{tpu_custom_call.1} parent=11 // pred_region
        _
      $region16: #{tpu_custom_call.1} parent=11 // pred_fallthru
        _
      // Predicated region
      $region17: #{tpu_custom_call.1} parent=11 // pred_check
        %p143 = pneg %p78
      $region18: #{tpu_custom_call.1} parent=11 // pred_check_branch
        %145 = sbr.rel (%p143) target = $region20
      $region19: #{tpu_custom_call.1} parent=11 // pred_region
        _
      $region20: #{tpu_custom_call.1} parent=11 // pred_fallthru
        _
      // Predicated region
      $region21: #{tpu_custom_call.1} parent=11 // pred_check
        %p146 = pneg %p99
      $region22: #{tpu_custom_call.1} parent=11 // pred_check_branch
        %148 = sbr.rel (%p146) target = $region24
      $region23: #{tpu_custom_call.1} parent=11 // pred_region
        _
      $region24: #{tpu_custom_call.1} parent=11 // pred_fallthru
        _
    $region12: #{tpu_custom_call.1} parent=5 // pred_fallthru
      _
    %p149 = scmp.lt.s32.totalorder %s10, 2
    // Predicated region
    $region25: #{tpu_custom_call.1} parent=5 // pred_check
      %p150 = pneg %p149
    $region26: #{tpu_custom_call.1} parent=5 // pred_check_branch
      %152 = sbr.rel (%p150) target = $region28
    $region27: #{tpu_custom_call.1} parent=5 // pred_region
      // Predicated region
      $region29: #{tpu_custom_call.1} parent=27 // pred_check
        %p153 = pneg %p30
      $region30: #{tpu_custom_call.1} parent=27 // pred_check_branch
        %155 = sbr.rel (%p153) target = $region32
      $region31: #{tpu_custom_call.1} parent=27 // pred_region
        %p156 = scmp.lt.s32.totalorder %s10, 1
        %s157 = scalar_select %p156, %s10, 1
        %s158 = smul.addr %s157, 32
        %s159 = smul.addr %s158, 8
        %s160 = scalar_lea.vmem %s0, %s159
      $region32: #{tpu_custom_call.1} parent=27 // pred_fallthru
        _
    $region28: #{tpu_custom_call.1} parent=5 // pred_fallthru
      _
    %p161 = scmp.le.s32.totalorder 1, %s10
    %p162 = scmp.lt.s32.totalorder %s10, 3
    %p163 = pnand %p161, %p162
    %p164 = pneg %p163
    // Predicated region
    $region33: #{tpu_custom_call.1} parent=5 // pred_check
      _
    $region34: #{tpu_custom_call.1} parent=5 // pred_check_branch
      %166 = sbr.rel (%p163) target = $region36
    $region35: #{tpu_custom_call.1} parent=5 // pred_region
      %s167 = ssub.s32 %s10, 1
      %p168 = scmp.lt.s32.totalorder %s15, 1
      %s169 = scalar_select %p168, %s15, 1
      %s170 = smul.addr %s169, 32
      %s171 = smul.addr %s170, 8
      %s172 = scalar_lea.vmem %s0, %s171
      %p173 = pneg %p36
      %p174 = pneg %p33
      %p175 = pneg %p57
      %p176 = pneg %p54
      %p177 = pneg %p78
      %p178 = pneg %p75
      %p179 = pneg %p99
      %p180 = pneg %p96
      %p181 = pneg %p125
      %p182 = pneg %p122
      %p183 = scmp.lt.s32.totalorder %s15, 1
      %s184 = scalar_select %p183, %s15, 1
      %s185 = smul.addr %s184, 32
      %s186 = smul.addr %s185, 8
      %s187 = scalar_lea.vmem %s4, %s186
      %p188 = scmp.lt.s32.totalorder %s15, 1
      %s189 = scalar_select %p188, %s15, 1
      %s190 = smul.addr %s189, 32
      %s191 = smul.addr %s190, 8
      %s192 = scalar_lea.vmem %s0, %s191
      %p193 = scmp.lt.s32.totalorder %s15, 1
      %s194 = scalar_select %p193, %s15, 1
      %s195 = smul.addr %s194, 32
      %s196 = smul.addr %s195, 8
      %s197 = scalar_lea.vmem %s4, %s196
      %vm198 = vcmask 31744
      %199 = vst.msk [vmem:[#allocation2] sm:$0xff] %vm198, 0.0
      %200 = vst.msk [vmem:[#allocation2 + $0x8] sm:$0xff] %vm198, 0.0
      %vm201 = vcmask 25600
      %202 = vst.msk [vmem:[#allocation2 + $0x10] sm:$0x3] %vm201, 0.0
      %203 = vst.msk [vmem:[#allocation2 + $0x18] sm:$0xff] %vm198, 0.0
      %204 = vst.msk [vmem:[#allocation2 + $0x20] sm:$0xff] %vm198, 0.0
      %205 = vst.msk [vmem:[#allocation2 + $0x28] sm:$0x3] %vm201, 0.0
      %206 = vst.msk [vmem:[#allocation2 + $0x30] sm:$0xff] %vm198, 0.0
      %207 = vst.msk [vmem:[#allocation2 + $0x38] sm:$0xff] %vm198, 0.0
      %208 = vst.msk [vmem:[#allocation2 + $0x40] sm:$0x3] %vm201, 0.0
      %209 = vst.msk [vmem:[#allocation2 + $0x48] sm:$0xff] %vm198, 0.0
      %210 = vst.msk [vmem:[#allocation2 + $0x50] sm:$0xff] %vm198, 0.0
      %211 = vst.msk [vmem:[#allocation2 + $0x58] sm:$0x3] %vm201, 0.0
      %212 = vst.msk [vmem:[#allocation2 + $0x60] sm:$0xff] %vm198, 0.0
      %213 = vst.msk [vmem:[#allocation2 + $0x68] sm:$0xff] %vm198, 0.0
      %214 = vst.msk [vmem:[#allocation2 + $0x70] sm:$0x3] %vm201, 0.0
      %215 = vst.msk [vmem:[#allocation2 + $0x78] sm:$0xff] %vm198, 0.0
      %216 = vst.msk [vmem:[#allocation2 + $0x80] sm:$0xff] %vm198, 0.0
      %217 = vst.msk [vmem:[#allocation2 + $0x88] sm:$0x3] %vm201, 0.0
      %218 = vst.msk [vmem:[#allocation2 + $0x90] sm:$0xff] %vm198, 0.0
      %219 = vst.msk [vmem:[#allocation2 + $0x98] sm:$0xff] %vm198, 0.0
      %220 = vst.msk [vmem:[#allocation2 + $0xa0] sm:$0x3] %vm201, 0.0
      %221 = vst.msk [vmem:[#allocation2 + $0xa8] sm:$0xff] %vm198, 0.0
      %222 = vst.msk [vmem:[#allocation2 + $0xb0] sm:$0xff] %vm198, 0.0
      %223 = vst.msk [vmem:[#allocation2 + $0xb8] sm:$0x3] %vm201, 0.0
      %224 = vst.msk [vmem:[#allocation2 + $0xc0] sm:$0xff] %vm198, 0.0
      %225 = vst.msk [vmem:[#allocation2 + $0xc8] sm:$0xff] %vm198, 0.0
      %226 = vst.msk [vmem:[#allocation2 + $0xd0] sm:$0x3] %vm201, 0.0
      %227 = vst.msk [vmem:[#allocation2 + $0xd8] sm:$0xff] %vm198, 0.0
      %228 = vst.msk [vmem:[#allocation2 + $0xe0] sm:$0xff] %vm198, 0.0
      %229 = vst.msk [vmem:[#allocation2 + $0xe8] sm:$0x3] %vm201, 0.0
      %230 = vst.msk [vmem:[#allocation2 + $0xf0] sm:$0xff] %vm198, 0.0
      %231 = vst.msk [vmem:[#allocation2 + $0xf8] sm:$0xff] %vm198, 0.0
      %232 = vst.msk [vmem:[#allocation2 + $0x100] sm:$0x3] %vm201, 0.0
      %233 = vst.msk [vmem:[#allocation2 + $0x108] sm:$0xff] %vm198, 0.0
      %234 = vst.msk [vmem:[#allocation2 + $0x110] sm:$0xff] %vm198, 0.0
      %235 = vst.msk [vmem:[#allocation2 + $0x118] sm:$0x3] %vm201, 0.0
      %236 = vst.msk [vmem:[#allocation2 + $0x120] sm:$0xff] %vm198, 0.0
      %237 = vst.msk [vmem:[#allocation2 + $0x128] sm:$0xff] %vm198, 0.0
      %238 = vst.msk [vmem:[#allocation2 + $0x130] sm:$0x3] %vm201, 0.0
      %239 = vst.msk [vmem:[#allocation2 + $0x138] sm:$0xff] %vm198, 0.0
      %240 = vst.msk [vmem:[#allocation2 + $0x140] sm:$0xff] %vm198, 0.0
      %241 = vst.msk [vmem:[#allocation2 + $0x148] sm:$0x3] %vm201, 0.0
      %242 = vst.msk [vmem:[#allocation2 + $0x150] sm:$0xff] %vm198, 0.0
      %243 = vst.msk [vmem:[#allocation2 + $0x158] sm:$0xff] %vm198, 0.0
      %244 = vst.msk [vmem:[#allocation2 + $0x160] sm:$0x3] %vm201, 0.0
      %245 = vst.msk [vmem:[#allocation2 + $0x168] sm:$0xff] %vm198, 0.0
      %246 = vst.msk [vmem:[#allocation2 + $0x170] sm:$0xff] %vm198, 0.0
      %247 = vst.msk [vmem:[#allocation2 + $0x178] sm:$0x3] %vm201, 0.0
      %248 = vst.msk [vmem:[#allocation2 + $0x180] sm:$0xff] %vm198, 0.0
      %249 = vst.msk [vmem:[#allocation2 + $0x188] sm:$0xff] %vm198, 0.0
      %250 = vst.msk [vmem:[#allocation2 + $0x190] sm:$0x3] %vm201, 0.0
      %251 = vst.msk [vmem:[#allocation2 + $0x198] sm:$0xff] %vm198, 0.0
      %252 = vst.msk [vmem:[#allocation2 + $0x1a0] sm:$0xff] %vm198, 0.0
      %253 = vst.msk [vmem:[#allocation2 + $0x1a8] sm:$0x3] %vm201, 0.0
      %v254 = vld [vmem:[%s192] sm:$0xff]
      %v255 = vld [vmem:[%s192 + $0x8] sm:$0xff]
      %v256 = vld [vmem:[%s192 + $0x10] sm:$0xff]
      %v257 = vld [vmem:[%s192 + $0x18] sm:$0xff]
      %v258 = vld [vmem:[%s192 + $0x20] sm:$0xff]
      %v259 = vld [vmem:[%s192 + $0x28] sm:$0xff]
      %v260 = vld [vmem:[%s192 + $0x30] sm:$0xff]
      %v261 = vld [vmem:[%s192 + $0x38] sm:$0xff]
      %v262 = vld [vmem:[%s192 + $0x40] sm:$0xff]
      %v263 = vld [vmem:[%s192 + $0x48] sm:$0xff]
      %v264 = vld [vmem:[%s192 + $0x50] sm:$0xff]
      %v265 = vld [vmem:[%s192 + $0x58] sm:$0xff]
      %v266 = vld [vmem:[%s192 + $0x60] sm:$0xff]
      %v267 = vld [vmem:[%s192 + $0x68] sm:$0xff]
      %v268 = vld [vmem:[%s192 + $0x70] sm:$0xff]
      %v269 = vld [vmem:[%s192 + $0x78] sm:$0xff]
      %v270 = vld [vmem:[%s192 + $0x80] sm:$0xff]
      %v271 = vld [vmem:[%s192 + $0x88] sm:$0xff]
      %v272 = vld [vmem:[%s192 + $0x90] sm:$0xff]
      %v273 = vld [vmem:[%s192 + $0x98] sm:$0xff]
      %v274 = vld [vmem:[%s192 + $0xa0] sm:$0xff]
      %v275 = vld [vmem:[%s192 + $0xa8] sm:$0xff]
      %v276 = vld [vmem:[%s192 + $0xb0] sm:$0xff]
      %v277 = vld [vmem:[%s192 + $0xb8] sm:$0xff]
      %v278 = vld [vmem:[%s192 + $0xc0] sm:$0xff]
      %v279 = vld [vmem:[%s192 + $0xc8] sm:$0xff]
      %v280 = vld [vmem:[%s192 + $0xd0] sm:$0xff]
      %v281 = vld [vmem:[%s192 + $0xd8] sm:$0xff]
      %v282 = vld [vmem:[%s192 + $0xe0] sm:$0xff]
      %v283 = vld [vmem:[%s192 + $0xe8] sm:$0xff]
      %v284 = vld [vmem:[%s192 + $0xf0] sm:$0xff]
      %v285 = vld [vmem:[%s192 + $0xf8] sm:$0xff]
      %s286 = scalar_lea.vmem [#allocation2], 24
      %287 = vst.msk [vmem:[%s286 + $0x1] sm:$0xff] %vm198, %v254
      %288 = vst.msk [vmem:[%s286 + $0x9] sm:$0xff] %vm198, %v255
      %289 = vst.msk [vmem:[%s286 + $0x19] sm:$0xff] %vm198, %v256
      %290 = vst.msk [vmem:[%s286 + $0x21] sm:$0xff] %vm198, %v257
      %291 = vst.msk [vmem:[%s286 + $0x31] sm:$0xff] %vm198, %v258
      %292 = vst.msk [vmem:[%s286 + $0x39] sm:$0xff] %vm198, %v259
      %293 = vst.msk [vmem:[%s286 + $0x49] sm:$0xff] %vm198, %v260
      %294 = vst.msk [vmem:[%s286 + $0x51] sm:$0xff] %vm198, %v261
      %295 = vst.msk [vmem:[%s286 + $0x61] sm:$0xff] %vm198, %v262
      %296 = vst.msk [vmem:[%s286 + $0x69] sm:$0xff] %vm198, %v263
      %297 = vst.msk [vmem:[%s286 + $0x79] sm:$0xff] %vm198, %v264
      %298 = vst.msk [vmem:[%s286 + $0x81] sm:$0xff] %vm198, %v265
      %299 = vst.msk [vmem:[%s286 + $0x91] sm:$0xff] %vm198, %v266
      %300 = vst.msk [vmem:[%s286 + $0x99] sm:$0xff] %vm198, %v267
      %301 = vst.msk [vmem:[%s286 + $0xa9] sm:$0xff] %vm198, %v268
      %302 = vst.msk [vmem:[%s286 + $0xb1] sm:$0xff] %vm198, %v269
      %303 = vst.msk [vmem:[%s286 + $0xc1] sm:$0xff] %vm198, %v270
      %304 = vst.msk [vmem:[%s286 + $0xc9] sm:$0xff] %vm198, %v271
      %305 = vst.msk [vmem:[%s286 + $0xd9] sm:$0xff] %vm198, %v272
      %306 = vst.msk [vmem:[%s286 + $0xe1] sm:$0xff] %vm198, %v273
      %307 = vst.msk [vmem:[%s286 + $0xf1] sm:$0xff] %vm198, %v274
      %308 = vst.msk [vmem:[%s286 + $0xf9] sm:$0xff] %vm198, %v275
      %309 = vst.msk [vmem:[%s286 + $0x109] sm:$0xff] %vm198, %v276
      %310 = vst.msk [vmem:[%s286 + $0x111] sm:$0xff] %vm198, %v277
      %311 = vst.msk [vmem:[%s286 + $0x121] sm:$0xff] %vm198, %v278
      %312 = vst.msk [vmem:[%s286 + $0x129] sm:$0xff] %vm198, %v279
      %313 = vst.msk [vmem:[%s286 + $0x139] sm:$0xff] %vm198, %v280
      %314 = vst.msk [vmem:[%s286 + $0x141] sm:$0xff] %vm198, %v281
      %315 = vst.msk [vmem:[%s286 + $0x151] sm:$0xff] %vm198, %v282
      %316 = vst.msk [vmem:[%s286 + $0x159] sm:$0xff] %vm198, %v283
      %317 = vst.msk [vmem:[%s286 + $0x169] sm:$0xff] %vm198, %v284
      %318 = vst.msk [vmem:[%s286 + $0x171] sm:$0xff] %vm198, %v285
      %v319 = vld [vmem:[%s1] sm:$0xff]
      %v320 = vld [vmem:[%s1 + $0x8] sm:$0x1]
      %v321 = vld [vmem:[#allocation2] sm:$0xff]
      %v322 = vld [vmem:[#allocation2 + $0x8] sm:$0xff]
      %v323 = vld [vmem:[#allocation2 + $0x18] sm:$0xff]
      %v324 = vld [vmem:[#allocation2 + $0x20] sm:$0xff]
      %v325 = vld [vmem:[#allocation2 + $0x30] sm:$0xff]
      %v326 = vld [vmem:[#allocation2 + $0x38] sm:$0xff]
      %v327 = vld [vmem:[#allocation2 + $0x48] sm:$0xff]
      %v328 = vld [vmem:[#allocation2 + $0x50] sm:$0xff]
      %v329 = vld [vmem:[#allocation2 + $0x60] sm:$0xff]
      %v330 = vld [vmem:[#allocation2 + $0x68] sm:$0xff]
      %v331 = vld [vmem:[#allocation2 + $0x78] sm:$0xff]
      %v332 = vld [vmem:[#allocation2 + $0x80] sm:$0xff]
      %v333 = vld [vmem:[#allocation2 + $0x90] sm:$0xff]
      %v334 = vld [vmem:[#allocation2 + $0x98] sm:$0xff]
      %v335 = vld [vmem:[#allocation2 + $0xa8] sm:$0xff]
      %v336 = vld [vmem:[#allocation2 + $0xb0] sm:$0xff]
      %v337 = vld [vmem:[#allocation2 + $0xc0] sm:$0xff]
      %v338 = vld [vmem:[#allocation2 + $0xc8] sm:$0xff]
      %v339 = vld [vmem:[#allocation2 + $0xd8] sm:$0xff]
      %v340 = vld [vmem:[#allocation2 + $0xe0] sm:$0xff]
      %v341 = vld [vmem:[#allocation2 + $0xf0] sm:$0xff]
      %v342 = vld [vmem:[#allocation2 + $0xf8] sm:$0xff]
      %v343 = vld [vmem:[#allocation2 + $0x108] sm:$0xff]
      %v344 = vld [vmem:[#allocation2 + $0x110] sm:$0xff]
      %v345 = vld [vmem:[#allocation2 + $0x120] sm:$0xff]
      %v346 = vld [vmem:[#allocation2 + $0x128] sm:$0xff]
      %v347 = vld [vmem:[#allocation2 + $0x138] sm:$0xff]
      %v348 = vld [vmem:[#allocation2 + $0x140] sm:$0xff]
      %v349 = vld [vmem:[#allocation2 + $0x150] sm:$0xff]
      %v350 = vld [vmem:[#allocation2 + $0x158] sm:$0xff]
      %v351 = vld [vmem:[#allocation2 + $0x168] sm:$0xff]
      %v352 = vld [vmem:[#allocation2 + $0x170] sm:$0xff]
      %v353 = vlaneseq
      %v354 = vshrl.u32 %v353, 7
      %v355 = vsub.s32 0, %v354
      %v356 = vrot.slane %v319, %v355
      %v357 = vmul.f32 %v321, %v356
      %v358 = vmul.f32 %v322, %v356
      %v359 = vmul.f32 %v323, %v356
      %v360 = vmul.f32 %v324, %v356
      %v361 = vmul.f32 %v325, %v356
      %v362 = vmul.f32 %v326, %v356
      %v363 = vmul.f32 %v327, %v356
      %v364 = vmul.f32 %v328, %v356
      %v365 = vmul.f32 %v329, %v356
      %v366 = vmul.f32 %v330, %v356
      %v367 = vmul.f32 %v331, %v356
      %v368 = vmul.f32 %v332, %v356
      %v369 = vmul.f32 %v333, %v356
      %v370 = vmul.f32 %v334, %v356
      %v371 = vmul.f32 %v335, %v356
      %v372 = vmul.f32 %v336, %v356
      %v373 = vmul.f32 %v337, %v356
      %v374 = vmul.f32 %v338, %v356
      %v375 = vmul.f32 %v339, %v356
      %v376 = vmul.f32 %v340, %v356
      %v377 = vmul.f32 %v341, %v356
      %v378 = vmul.f32 %v342, %v356
      %v379 = vmul.f32 %v343, %v356
      %v380 = vmul.f32 %v344, %v356
      %v381 = vmul.f32 %v345, %v356
      %v382 = vmul.f32 %v346, %v356
      %v383 = vmul.f32 %v347, %v356
      %v384 = vmul.f32 %v348, %v356
      %v385 = vmul.f32 %v349, %v356
      %v386 = vmul.f32 %v350, %v356
      %v387 = vmul.f32 %v351, %v356
      %v388 = vmul.f32 %v352, %v356
      %v389 = vadd.f32 %v357, 0.0
      %v390 = vadd.f32 %v358, 0.0
      %v391 = vadd.f32 %v359, 0.0
      %v392 = vadd.f32 %v360, 0.0
      %v393 = vadd.f32 %v361, 0.0
      %v394 = vadd.f32 %v362, 0.0
      %v395 = vadd.f32 %v363, 0.0
      %v396 = vadd.f32 %v364, 0.0
      %v397 = vadd.f32 %v365, 0.0
      %v398 = vadd.f32 %v366, 0.0
      %v399 = vadd.f32 %v367, 0.0
      %v400 = vadd.f32 %v368, 0.0
      %v401 = vadd.f32 %v369, 0.0
      %v402 = vadd.f32 %v370, 0.0
      %v403 = vadd.f32 %v371, 0.0
      %v404 = vadd.f32 %v372, 0.0
      %v405 = vadd.f32 %v373, 0.0
      %v406 = vadd.f32 %v374, 0.0
      %v407 = vadd.f32 %v375, 0.0
      %v408 = vadd.f32 %v376, 0.0
      %v409 = vadd.f32 %v377, 0.0
      %v410 = vadd.f32 %v378, 0.0
      %v411 = vadd.f32 %v379, 0.0
      %v412 = vadd.f32 %v380, 0.0
      %v413 = vadd.f32 %v381, 0.0
      %v414 = vadd.f32 %v382, 0.0
      %v415 = vadd.f32 %v383, 0.0
      %v416 = vadd.f32 %v384, 0.0
      %v417 = vadd.f32 %v385, 0.0
      %v418 = vadd.f32 %v386, 0.0
      %v419 = vadd.f32 %v387, 0.0
      %v420 = vadd.f32 %v388, 0.0
      %v421 = vld [vmem:[#allocation2 + $0x1] sm:$0xff]
      %v422 = vld [vmem:[#allocation2 + $0x9] sm:$0xff]
      %v423 = vld [vmem:[#allocation2 + $0x19] sm:$0xff]
      %v424 = vld [vmem:[#allocation2 + $0x21] sm:$0xff]
      %v425 = vld [vmem:[#allocation2 + $0x31] sm:$0xff]
      %v426 = vld [vmem:[#allocation2 + $0x39] sm:$0xff]
      %v427 = vld [vmem:[#allocation2 + $0x49] sm:$0xff]
      %v428 = vld [vmem:[#allocation2 + $0x51] sm:$0xff]
      %v429 = vld [vmem:[#allocation2 + $0x61] sm:$0xff]
      %v430 = vld [vmem:[#allocation2 + $0x69] sm:$0xff]
      %v431 = vld [vmem:[#allocation2 + $0x79] sm:$0xff]
      %v432 = vld [vmem:[#allocation2 + $0x81] sm:$0xff]
      %v433 = vld [vmem:[#allocation2 + $0x91] sm:$0xff]
      %v434 = vld [vmem:[#allocation2 + $0x99] sm:$0xff]
      %v435 = vld [vmem:[#allocation2 + $0xa9] sm:$0xff]
      %v436 = vld [vmem:[#allocation2 + $0xb1] sm:$0xff]
      %v437 = vld [vmem:[#allocation2 + $0xc1] sm:$0xff]
      %v438 = vld [vmem:[#allocation2 + $0xc9] sm:$0xff]
      %v439 = vld [vmem:[#allocation2 + $0xd9] sm:$0xff]
      %v440 = vld [vmem:[#allocation2 + $0xe1] sm:$0xff]
      %v441 = vld [vmem:[#allocation2 + $0xf1] sm:$0xff]
      %v442 = vld [vmem:[#allocation2 + $0xf9] sm:$0xff]
      %v443 = vld [vmem:[#allocation2 + $0x109] sm:$0xff]
      %v444 = vld [vmem:[#allocation2 + $0x111] sm:$0xff]
      %v445 = vld [vmem:[#allocation2 + $0x121] sm:$0xff]
      %v446 = vld [vmem:[#allocation2 + $0x129] sm:$0xff]
      %v447 = vld [vmem:[#allocation2 + $0x139] sm:$0xff]
      %v448 = vld [vmem:[#allocation2 + $0x141] sm:$0xff]
      %v449 = vld [vmem:[#allocation2 + $0x151] sm:$0xff]
      %v450 = vld [vmem:[#allocation2 + $0x159] sm:$0xff]
      %v451 = vld [vmem:[#allocation2 + $0x169] sm:$0xff]
      %v452 = vld [vmem:[#allocation2 + $0x171] sm:$0xff]
      %v453 = vlaneseq
      %v454 = vshrl.u32 %v453, 7
      %v455 = vsub.s32 1, %v454
      %v456 = vrot.slane %v319, %v455
      %v457 = vmul.f32 %v421, %v456
      %v458 = vmul.f32 %v422, %v456
      %v459 = vmul.f32 %v423, %v456
      %v460 = vmul.f32 %v424, %v456
      %v461 = vmul.f32 %v425, %v456
      %v462 = vmul.f32 %v426, %v456
      %v463 = vmul.f32 %v427, %v456
      %v464 = vmul.f32 %v428, %v456
      %v465 = vmul.f32 %v429, %v456
      %v466 = vmul.f32 %v430, %v456
      %v467 = vmul.f32 %v431, %v456
      %v468 = vmul.f32 %v432, %v456
      %v469 = vmul.f32 %v433, %v456
      %v470 = vmul.f32 %v434, %v456
      %v471 = vmul.f32 %v435, %v456
      %v472 = vmul.f32 %v436, %v456
      %v473 = vmul.f32 %v437, %v456
      %v474 = vmul.f32 %v438, %v456
      %v475 = vmul.f32 %v439, %v456
      %v476 = vmul.f32 %v440, %v456
      %v477 = vmul.f32 %v441, %v456
      %v478 = vmul.f32 %v442, %v456
      %v479 = vmul.f32 %v443, %v456
      %v480 = vmul.f32 %v444, %v456
      %v481 = vmul.f32 %v445, %v456
      %v482 = vmul.f32 %v446, %v456
      %v483 = vmul.f32 %v447, %v456
      %v484 = vmul.f32 %v448, %v456
      %v485 = vmul.f32 %v449, %v456
      %v486 = vmul.f32 %v450, %v456
      %v487 = vmul.f32 %v451, %v456
      %v488 = vmul.f32 %v452, %v456
      %v489 = vadd.f32 %v389, %v457
      %v490 = vadd.f32 %v390, %v458
      %v491 = vadd.f32 %v391, %v459
      %v492 = vadd.f32 %v392, %v460
      %v493 = vadd.f32 %v393, %v461
      %v494 = vadd.f32 %v394, %v462
      %v495 = vadd.f32 %v395, %v463
      %v496 = vadd.f32 %v396, %v464
      %v497 = vadd.f32 %v397, %v465
      %v498 = vadd.f32 %v398, %v466
      %v499 = vadd.f32 %v399, %v467
      %v500 = vadd.f32 %v400, %v468
      %v501 = vadd.f32 %v401, %v469
      %v502 = vadd.f32 %v402, %v470
      %v503 = vadd.f32 %v403, %v471
      %v504 = vadd.f32 %v404, %v472
      %v505 = vadd.f32 %v405, %v473
      %v506 = vadd.f32 %v406, %v474
      %v507 = vadd.f32 %v407, %v475
      %v508 = vadd.f32 %v408, %v476
      %v509 = vadd.f32 %v409, %v477
      %v510 = vadd.f32 %v410, %v478
      %v511 = vadd.f32 %v411, %v479
      %v512 = vadd.f32 %v412, %v480
      %v513 = vadd.f32 %v413, %v481
      %v514 = vadd.f32 %v414, %v482
      %v515 = vadd.f32 %v415, %v483
      %v516 = vadd.f32 %v416, %v484
      %v517 = vadd.f32 %v417, %v485
      %v518 = vadd.f32 %v418, %v486
      %v519 = vadd.f32 %v419, %v487
      %v520 = vadd.f32 %v420, %v488
      %v521 = vld [vmem:[#allocation2 + $0x2] sm:$0xff]
      %v522 = vld [vmem:[#allocation2 + $0xa] sm:$0xff]
      %v523 = vld [vmem:[#allocation2 + $0x1a] sm:$0xff]
      %v524 = vld [vmem:[#allocation2 + $0x22] sm:$0xff]
      %v525 = vld [vmem:[#allocation2 + $0x32] sm:$0xff]
      %v526 = vld [vmem:[#allocation2 + $0x3a] sm:$0xff]
      %v527 = vld [vmem:[#allocation2 + $0x4a] sm:$0xff]
      %v528 = vld [vmem:[#allocation2 + $0x52] sm:$0xff]
      %v529 = vld [vmem:[#allocation2 + $0x62] sm:$0xff]
      %v530 = vld [vmem:[#allocation2 + $0x6a] sm:$0xff]
      %v531 = vld [vmem:[#allocation2 + $0x7a] sm:$0xff]
      %v532 = vld [vmem:[#allocation2 + $0x82] sm:$0xff]
      %v533 = vld [vmem:[#allocation2 + $0x92] sm:$0xff]
      %v534 = vld [vmem:[#allocation2 + $0x9a] sm:$0xff]
      %v535 = vld [vmem:[#allocation2 + $0xaa] sm:$0xff]
      %v536 = vld [vmem:[#allocation2 + $0xb2] sm:$0xff]
      %v537 = vld [vmem:[#allocation2 + $0xc2] sm:$0xff]
      %v538 = vld [vmem:[#allocation2 + $0xca] sm:$0xff]
      %v539 = vld [vmem:[#allocation2 + $0xda] sm:$0xff]
      %v540 = vld [vmem:[#allocation2 + $0xe2] sm:$0xff]
      %v541 = vld [vmem:[#allocation2 + $0xf2] sm:$0xff]
      %v542 = vld [vmem:[#allocation2 + $0xfa] sm:$0xff]
      %v543 = vld [vmem:[#allocation2 + $0x10a] sm:$0xff]
      %v544 = vld [vmem:[#allocation2 + $0x112] sm:$0xff]
      %v545 = vld [vmem:[#allocation2 + $0x122] sm:$0xff]
      %v546 = vld [vmem:[#allocation2 + $0x12a] sm:$0xff]
      %v547 = vld [vmem:[#allocation2 + $0x13a] sm:$0xff]
      %v548 = vld [vmem:[#allocation2 + $0x142] sm:$0xff]
      %v549 = vld [vmem:[#allocation2 + $0x152] sm:$0xff]
      %v550 = vld [vmem:[#allocation2 + $0x15a] sm:$0xff]
      %v551 = vld [vmem:[#allocation2 + $0x16a] sm:$0xff]
      %v552 = vld [vmem:[#allocation2 + $0x172] sm:$0xff]
      %v553 = vlaneseq
      %v554 = vshrl.u32 %v553, 7
      %v555 = vsub.s32 2, %v554
      %v556 = vrot.slane %v319, %v555
      %v557 = vmul.f32 %v521, %v556
      %v558 = vmul.f32 %v522, %v556
      %v559 = vmul.f32 %v523, %v556
      %v560 = vmul.f32 %v524, %v556
      %v561 = vmul.f32 %v525, %v556
      %v562 = vmul.f32 %v526, %v556
      %v563 = vmul.f32 %v527, %v556
      %v564 = vmul.f32 %v528, %v556
      %v565 = vmul.f32 %v529, %v556
      %v566 = vmul.f32 %v530, %v556
      %v567 = vmul.f32 %v531, %v556
      %v568 = vmul.f32 %v532, %v556
      %v569 = vmul.f32 %v533, %v556
      %v570 = vmul.f32 %v534, %v556
      %v571 = vmul.f32 %v535, %v556
      %v572 = vmul.f32 %v536, %v556
      %v573 = vmul.f32 %v537, %v556
      %v574 = vmul.f32 %v538, %v556
      %v575 = vmul.f32 %v539, %v556
      %v576 = vmul.f32 %v540, %v556
      %v577 = vmul.f32 %v541, %v556
      %v578 = vmul.f32 %v542, %v556
      %v579 = vmul.f32 %v543, %v556
      %v580 = vmul.f32 %v544, %v556
      %v581 = vmul.f32 %v545, %v556
      %v582 = vmul.f32 %v546, %v556
      %v583 = vmul.f32 %v547, %v556
      %v584 = vmul.f32 %v548, %v556
      %v585 = vmul.f32 %v549, %v556
      %v586 = vmul.f32 %v550, %v556
      %v587 = vmul.f32 %v551, %v556
      %v588 = vmul.f32 %v552, %v556
      %v589 = vadd.f32 %v489, %v557
      %v590 = vadd.f32 %v490, %v558
      %v591 = vadd.f32 %v491, %v559
      %v592 = vadd.f32 %v492, %v560
      %v593 = vadd.f32 %v493, %v561
      %v594 = vadd.f32 %v494, %v562
      %v595 = vadd.f32 %v495, %v563
      %v596 = vadd.f32 %v496, %v564
      %v597 = vadd.f32 %v497, %v565
      %v598 = vadd.f32 %v498, %v566
      %v599 = vadd.f32 %v499, %v567
      %v600 = vadd.f32 %v500, %v568
      %v601 = vadd.f32 %v501, %v569
      %v602 = vadd.f32 %v502, %v570
      %v603 = vadd.f32 %v503, %v571
      %v604 = vadd.f32 %v504, %v572
      %v605 = vadd.f32 %v505, %v573
      %v606 = vadd.f32 %v506, %v574
      %v607 = vadd.f32 %v507, %v575
      %v608 = vadd.f32 %v508, %v576
      %v609 = vadd.f32 %v509, %v577
      %v610 = vadd.f32 %v510, %v578
      %v611 = vadd.f32 %v511, %v579
      %v612 = vadd.f32 %v512, %v580
      %v613 = vadd.f32 %v513, %v581
      %v614 = vadd.f32 %v514, %v582
      %v615 = vadd.f32 %v515, %v583
      %v616 = vadd.f32 %v516, %v584
      %v617 = vadd.f32 %v517, %v585
      %v618 = vadd.f32 %v518, %v586
      %v619 = vadd.f32 %v519, %v587
      %v620 = vadd.f32 %v520, %v588
      %v621 = vld [vmem:[%s286] sm:$0xff]
      %v622 = vld [vmem:[%s286 + $0x8] sm:$0xff]
      %v623 = vld [vmem:[%s286 + $0x18] sm:$0xff]
      %v624 = vld [vmem:[%s286 + $0x20] sm:$0xff]
      %v625 = vld [vmem:[%s286 + $0x30] sm:$0xff]
      %v626 = vld [vmem:[%s286 + $0x38] sm:$0xff]
      %v627 = vld [vmem:[%s286 + $0x48] sm:$0xff]
      %v628 = vld [vmem:[%s286 + $0x50] sm:$0xff]
      %v629 = vld [vmem:[%s286 + $0x60] sm:$0xff]
      %v630 = vld [vmem:[%s286 + $0x68] sm:$0xff]
      %v631 = vld [vmem:[%s286 + $0x78] sm:$0xff]
      %v632 = vld [vmem:[%s286 + $0x80] sm:$0xff]
      %v633 = vld [vmem:[%s286 + $0x90] sm:$0xff]
      %v634 = vld [vmem:[%s286 + $0x98] sm:$0xff]
      %v635 = vld [vmem:[%s286 + $0xa8] sm:$0xff]
      %v636 = vld [vmem:[%s286 + $0xb0] sm:$0xff]
      %v637 = vld [vmem:[%s286 + $0xc0] sm:$0xff]
      %v638 = vld [vmem:[%s286 + $0xc8] sm:$0xff]
      %v639 = vld [vmem:[%s286 + $0xd8] sm:$0xff]
      %v640 = vld [vmem:[%s286 + $0xe0] sm:$0xff]
      %v641 = vld [vmem:[%s286 + $0xf0] sm:$0xff]
      %v642 = vld [vmem:[%s286 + $0xf8] sm:$0xff]
      %v643 = vld [vmem:[%s286 + $0x108] sm:$0xff]
      %v644 = vld [vmem:[%s286 + $0x110] sm:$0xff]
      %v645 = vld [vmem:[%s286 + $0x120] sm:$0xff]
      %v646 = vld [vmem:[%s286 + $0x128] sm:$0xff]
      %v647 = vld [vmem:[%s286 + $0x138] sm:$0xff]
      %v648 = vld [vmem:[%s286 + $0x140] sm:$0xff]
      %v649 = vld [vmem:[%s286 + $0x150] sm:$0xff]
      %v650 = vld [vmem:[%s286 + $0x158] sm:$0xff]
      %v651 = vld [vmem:[%s286 + $0x168] sm:$0xff]
      %v652 = vld [vmem:[%s286 + $0x170] sm:$0xff]
      %v653 = vlaneseq
      %v654 = vshrl.u32 %v653, 7
      %v655 = vsub.s32 3, %v654
      %v656 = vrot.slane %v319, %v655
      %v657 = vmul.f32 %v621, %v656
      %v658 = vmul.f32 %v622, %v656
      %v659 = vmul.f32 %v623, %v656
      %v660 = vmul.f32 %v624, %v656
      %v661 = vmul.f32 %v625, %v656
      %v662 = vmul.f32 %v626, %v656
      %v663 = vmul.f32 %v627, %v656
      %v664 = vmul.f32 %v628, %v656
      %v665 = vmul.f32 %v629, %v656
      %v666 = vmul.f32 %v630, %v656
      %v667 = vmul.f32 %v631, %v656
      %v668 = vmul.f32 %v632, %v656
      %v669 = vmul.f32 %v633, %v656
      %v670 = vmul.f32 %v634, %v656
      %v671 = vmul.f32 %v635, %v656
      %v672 = vmul.f32 %v636, %v656
      %v673 = vmul.f32 %v637, %v656
      %v674 = vmul.f32 %v638, %v656
      %v675 = vmul.f32 %v639, %v656
      %v676 = vmul.f32 %v640, %v656
      %v677 = vmul.f32 %v641, %v656
      %v678 = vmul.f32 %v642, %v656
      %v679 = vmul.f32 %v643, %v656
      %v680 = vmul.f32 %v644, %v656
      %v681 = vmul.f32 %v645, %v656
      %v682 = vmul.f32 %v646, %v656
      %v683 = vmul.f32 %v647, %v656
      %v684 = vmul.f32 %v648, %v656
      %v685 = vmul.f32 %v649, %v656
      %v686 = vmul.f32 %v650, %v656
      %v687 = vmul.f32 %v651, %v656
      %v688 = vmul.f32 %v652, %v656
      %v689 = vadd.f32 %v589, %v657
      %v690 = vadd.f32 %v590, %v658
      %v691 = vadd.f32 %v591, %v659
      %v692 = vadd.f32 %v592, %v660
      %v693 = vadd.f32 %v593, %v661
      %v694 = vadd.f32 %v594, %v662
      %v695 = vadd.f32 %v595, %v663
      %v696 = vadd.f32 %v596, %v664
      %v697 = vadd.f32 %v597, %v665
      %v698 = vadd.f32 %v598, %v666
      %v699 = vadd.f32 %v599, %v667
      %v700 = vadd.f32 %v600, %v668
      %v701 = vadd.f32 %v601, %v669
      %v702 = vadd.f32 %v602, %v670
      %v703 = vadd.f32 %v603, %v671
      %v704 = vadd.f32 %v604, %v672
      %v705 = vadd.f32 %v605, %v673
      %v706 = vadd.f32 %v606, %v674
      %v707 = vadd.f32 %v607, %v675
      %v708 = vadd.f32 %v608, %v676
      %v709 = vadd.f32 %v609, %v677
      %v710 = vadd.f32 %v610, %v678
      %v711 = vadd.f32 %v611, %v679
      %v712 = vadd.f32 %v612, %v680
      %v713 = vadd.f32 %v613, %v681
      %v714 = vadd.f32 %v614, %v682
      %v715 = vadd.f32 %v615, %v683
      %v716 = vadd.f32 %v616, %v684
      %v717 = vadd.f32 %v617, %v685
      %v718 = vadd.f32 %v618, %v686
      %v719 = vadd.f32 %v619, %v687
      %v720 = vadd.f32 %v620, %v688
      %v721 = vld [vmem:[%s286 + $0x1] sm:$0xff]
      %v722 = vld [vmem:[%s286 + $0x9] sm:$0xff]
      %v723 = vld [vmem:[%s286 + $0x19] sm:$0xff]
      %v724 = vld [vmem:[%s286 + $0x21] sm:$0xff]
      %v725 = vld [vmem:[%s286 + $0x31] sm:$0xff]
      %v726 = vld [vmem:[%s286 + $0x39] sm:$0xff]
      %v727 = vld [vmem:[%s286 + $0x49] sm:$0xff]
      %v728 = vld [vmem:[%s286 + $0x51] sm:$0xff]
      %v729 = vld [vmem:[%s286 + $0x61] sm:$0xff]
      %v730 = vld [vmem:[%s286 + $0x69] sm:$0xff]
      %v731 = vld [vmem:[%s286 + $0x79] sm:$0xff]
      %v732 = vld [vmem:[%s286 + $0x81] sm:$0xff]
      %v733 = vld [vmem:[%s286 + $0x91] sm:$0xff]
      %v734 = vld [vmem:[%s286 + $0x99] sm:$0xff]
      %v735 = vld [vmem:[%s286 + $0xa9] sm:$0xff]
      %v736 = vld [vmem:[%s286 + $0xb1] sm:$0xff]
      %v737 = vld [vmem:[%s286 + $0xc1] sm:$0xff]
      %v738 = vld [vmem:[%s286 + $0xc9] sm:$0xff]
      %v739 = vld [vmem:[%s286 + $0xd9] sm:$0xff]
      %v740 = vld [vmem:[%s286 + $0xe1] sm:$0xff]
      %v741 = vld [vmem:[%s286 + $0xf1] sm:$0xff]
      %v742 = vld [vmem:[%s286 + $0xf9] sm:$0xff]
      %v743 = vld [vmem:[%s286 + $0x109] sm:$0xff]
      %v744 = vld [vmem:[%s286 + $0x111] sm:$0xff]
      %v745 = vld [vmem:[%s286 + $0x121] sm:$0xff]
      %v746 = vld [vmem:[%s286 + $0x129] sm:$0xff]
      %v747 = vld [vmem:[%s286 + $0x139] sm:$0xff]
      %v748 = vld [vmem:[%s286 + $0x141] sm:$0xff]
      %v749 = vld [vmem:[%s286 + $0x151] sm:$0xff]
      %v750 = vld [vmem:[%s286 + $0x159] sm:$0xff]
      %v751 = vld [vmem:[%s286 + $0x169] sm:$0xff]
      %v752 = vld [vmem:[%s286 + $0x171] sm:$0xff]
      %v753 = vlaneseq
      %v754 = vshrl.u32 %v753, 7
      %v755 = vsub.s32 4, %v754
      %v756 = vrot.slane %v319, %v755
      %v757 = vmul.f32 %v721, %v756
      %v758 = vmul.f32 %v722, %v756
      %v759 = vmul.f32 %v723, %v756
      %v760 = vmul.f32 %v724, %v756
      %v761 = vmul.f32 %v725, %v756
      %v762 = vmul.f32 %v726, %v756
      %v763 = vmul.f32 %v727, %v756
      %v764 = vmul.f32 %v728, %v756
      %v765 = vmul.f32 %v729, %v756
      %v766 = vmul.f32 %v730, %v756
      %v767 = vmul.f32 %v731, %v756
      %v768 = vmul.f32 %v732, %v756
      %v769 = vmul.f32 %v733, %v756
      %v770 = vmul.f32 %v734, %v756
      %v771 = vmul.f32 %v735, %v756
      %v772 = vmul.f32 %v736, %v756
      %v773 = vmul.f32 %v737, %v756
      %v774 = vmul.f32 %v738, %v756
      %v775 = vmul.f32 %v739, %v756
      %v776 = vmul.f32 %v740, %v756
      %v777 = vmul.f32 %v741, %v756
      %v778 = vmul.f32 %v742, %v756
      %v779 = vmul.f32 %v743, %v756
      %v780 = vmul.f32 %v744, %v756
      %v781 = vmul.f32 %v745, %v756
      %v782 = vmul.f32 %v746, %v756
      %v783 = vmul.f32 %v747, %v756
      %v784 = vmul.f32 %v748, %v756
      %v785 = vmul.f32 %v749, %v756
      %v786 = vmul.f32 %v750, %v756
      %v787 = vmul.f32 %v751, %v756
      %v788 = vmul.f32 %v752, %v756
      %v789 = vadd.f32 %v689, %v757
      %v790 = vadd.f32 %v690, %v758
      %v791 = vadd.f32 %v691, %v759
      %v792 = vadd.f32 %v692, %v760
      %v793 = vadd.f32 %v693, %v761
      %v794 = vadd.f32 %v694, %v762
      %v795 = vadd.f32 %v695, %v763
      %v796 = vadd.f32 %v696, %v764
      %v797 = vadd.f32 %v697, %v765
      %v798 = vadd.f32 %v698, %v766
      %v799 = vadd.f32 %v699, %v767
      %v800 = vadd.f32 %v700, %v768
      %v801 = vadd.f32 %v701, %v769
      %v802 = vadd.f32 %v702, %v770
      %v803 = vadd.f32 %v703, %v771
      %v804 = vadd.f32 %v704, %v772
      %v805 = vadd.f32 %v705, %v773
      %v806 = vadd.f32 %v706, %v774
      %v807 = vadd.f32 %v707, %v775
      %v808 = vadd.f32 %v708, %v776
      %v809 = vadd.f32 %v709, %v777
      %v810 = vadd.f32 %v710, %v778
      %v811 = vadd.f32 %v711, %v779
      %v812 = vadd.f32 %v712, %v780
      %v813 = vadd.f32 %v713, %v781
      %v814 = vadd.f32 %v714, %v782
      %v815 = vadd.f32 %v715, %v783
      %v816 = vadd.f32 %v716, %v784
      %v817 = vadd.f32 %v717, %v785
      %v818 = vadd.f32 %v718, %v786
      %v819 = vadd.f32 %v719, %v787
      %v820 = vadd.f32 %v720, %v788
      %v821 = vld [vmem:[%s286 + $0x2] sm:$0xff]
      %v822 = vld [vmem:[%s286 + $0xa] sm:$0xff]
      %v823 = vld [vmem:[%s286 + $0x1a] sm:$0xff]
      %v824 = vld [vmem:[%s286 + $0x22] sm:$0xff]
      %v825 = vld [vmem:[%s286 + $0x32] sm:$0xff]
      %v826 = vld [vmem:[%s286 + $0x3a] sm:$0xff]
      %v827 = vld [vmem:[%s286 + $0x4a] sm:$0xff]
      %v828 = vld [vmem:[%s286 + $0x52] sm:$0xff]
      %v829 = vld [vmem:[%s286 + $0x62] sm:$0xff]
      %v830 = vld [vmem:[%s286 + $0x6a] sm:$0xff]
      %v831 = vld [vmem:[%s286 + $0x7a] sm:$0xff]
      %v832 = vld [vmem:[%s286 + $0x82] sm:$0xff]
      %v833 = vld [vmem:[%s286 + $0x92] sm:$0xff]
      %v834 = vld [vmem:[%s286 + $0x9a] sm:$0xff]
      %v835 = vld [vmem:[%s286 + $0xaa] sm:$0xff]
      %v836 = vld [vmem:[%s286 + $0xb2] sm:$0xff]
      %v837 = vld [vmem:[%s286 + $0xc2] sm:$0xff]
      %v838 = vld [vmem:[%s286 + $0xca] sm:$0xff]
      %v839 = vld [vmem:[%s286 + $0xda] sm:$0xff]
      %v840 = vld [vmem:[%s286 + $0xe2] sm:$0xff]
      %v841 = vld [vmem:[%s286 + $0xf2] sm:$0xff]
      %v842 = vld [vmem:[%s286 + $0xfa] sm:$0xff]
      %v843 = vld [vmem:[%s286 + $0x10a] sm:$0xff]
      %v844 = vld [vmem:[%s286 + $0x112] sm:$0xff]
      %v845 = vld [vmem:[%s286 + $0x122] sm:$0xff]
      %v846 = vld [vmem:[%s286 + $0x12a] sm:$0xff]
      %v847 = vld [vmem:[%s286 + $0x13a] sm:$0xff]
      %v848 = vld [vmem:[%s286 + $0x142] sm:$0xff]
      %v849 = vld [vmem:[%s286 + $0x152] sm:$0xff]
      %v850 = vld [vmem:[%s286 + $0x15a] sm:$0xff]
      %v851 = vld [vmem:[%s286 + $0x16a] sm:$0xff]
      %v852 = vld [vmem:[%s286 + $0x172] sm:$0xff]
      %v853 = vlaneseq
      %v854 = vshrl.u32 %v853, 7
      %v855 = vsub.s32 5, %v854
      %v856 = vrot.slane %v319, %v855
      %v857 = vmul.f32 %v821, %v856
      %v858 = vmul.f32 %v822, %v856
      %v859 = vmul.f32 %v823, %v856
      %v860 = vmul.f32 %v824, %v856
      %v861 = vmul.f32 %v825, %v856
      %v862 = vmul.f32 %v826, %v856
      %v863 = vmul.f32 %v827, %v856
      %v864 = vmul.f32 %v828, %v856
      %v865 = vmul.f32 %v829, %v856
      %v866 = vmul.f32 %v830, %v856
      %v867 = vmul.f32 %v831, %v856
      %v868 = vmul.f32 %v832, %v856
      %v869 = vmul.f32 %v833, %v856
      %v870 = vmul.f32 %v834, %v856
      %v871 = vmul.f32 %v835, %v856
      %v872 = vmul.f32 %v836, %v856
      %v873 = vmul.f32 %v837, %v856
      %v874 = vmul.f32 %v838, %v856
      %v875 = vmul.f32 %v839, %v856
      %v876 = vmul.f32 %v840, %v856
      %v877 = vmul.f32 %v841, %v856
      %v878 = vmul.f32 %v842, %v856
      %v879 = vmul.f32 %v843, %v856
      %v880 = vmul.f32 %v844, %v856
      %v881 = vmul.f32 %v845, %v856
      %v882 = vmul.f32 %v846, %v856
      %v883 = vmul.f32 %v847, %v856
      %v884 = vmul.f32 %v848, %v856
      %v885 = vmul.f32 %v849, %v856
      %v886 = vmul.f32 %v850, %v856
      %v887 = vmul.f32 %v851, %v856
      %v888 = vmul.f32 %v852, %v856
      %v889 = vadd.f32 %v789, %v857
      %v890 = vadd.f32 %v790, %v858
      %v891 = vadd.f32 %v791, %v859
      %v892 = vadd.f32 %v792, %v860
      %v893 = vadd.f32 %v793, %v861
      %v894 = vadd.f32 %v794, %v862
      %v895 = vadd.f32 %v795, %v863
      %v896 = vadd.f32 %v796, %v864
      %v897 = vadd.f32 %v797, %v865
      %v898 = vadd.f32 %v798, %v866
      %v899 = vadd.f32 %v799, %v867
      %v900 = vadd.f32 %v800, %v868
      %v901 = vadd.f32 %v801, %v869
      %v902 = vadd.f32 %v802, %v870
      %v903 = vadd.f32 %v803, %v871
      %v904 = vadd.f32 %v804, %v872
      %v905 = vadd.f32 %v805, %v873
      %v906 = vadd.f32 %v806, %v874
      %v907 = vadd.f32 %v807, %v875
      %v908 = vadd.f32 %v808, %v876
      %v909 = vadd.f32 %v809, %v877
      %v910 = vadd.f32 %v810, %v878
      %v911 = vadd.f32 %v811, %v879
      %v912 = vadd.f32 %v812, %v880
      %v913 = vadd.f32 %v813, %v881
      %v914 = vadd.f32 %v814, %v882
      %v915 = vadd.f32 %v815, %v883
      %v916 = vadd.f32 %v816, %v884
      %v917 = vadd.f32 %v817, %v885
      %v918 = vadd.f32 %v818, %v886
      %v919 = vadd.f32 %v819, %v887
      %v920 = vadd.f32 %v820, %v888
      %s921 = scalar_lea.vmem [#allocation2], 48
      %v922 = vld [vmem:[%s921] sm:$0xff]
      %v923 = vld [vmem:[%s921 + $0x8] sm:$0xff]
      %v924 = vld [vmem:[%s921 + $0x18] sm:$0xff]
      %v925 = vld [vmem:[%s921 + $0x20] sm:$0xff]
      %v926 = vld [vmem:[%s921 + $0x30] sm:$0xff]
      %v927 = vld [vmem:[%s921 + $0x38] sm:$0xff]
      %v928 = vld [vmem:[%s921 + $0x48] sm:$0xff]
      %v929 = vld [vmem:[%s921 + $0x50] sm:$0xff]
      %v930 = vld [vmem:[%s921 + $0x60] sm:$0xff]
      %v931 = vld [vmem:[%s921 + $0x68] sm:$0xff]
      %v932 = vld [vmem:[%s921 + $0x78] sm:$0xff]
      %v933 = vld [vmem:[%s921 + $0x80] sm:$0xff]
      %v934 = vld [vmem:[%s921 + $0x90] sm:$0xff]
      %v935 = vld [vmem:[%s921 + $0x98] sm:$0xff]
      %v936 = vld [vmem:[%s921 + $0xa8] sm:$0xff]
      %v937 = vld [vmem:[%s921 + $0xb0] sm:$0xff]
      %v938 = vld [vmem:[%s921 + $0xc0] sm:$0xff]
      %v939 = vld [vmem:[%s921 + $0xc8] sm:$0xff]
      %v940 = vld [vmem:[%s921 + $0xd8] sm:$0xff]
      %v941 = vld [vmem:[%s921 + $0xe0] sm:$0xff]
      %v942 = vld [vmem:[%s921 + $0xf0] sm:$0xff]
      %v943 = vld [vmem:[%s921 + $0xf8] sm:$0xff]
      %v944 = vld [vmem:[%s921 + $0x108] sm:$0xff]
      %v945 = vld [vmem:[%s921 + $0x110] sm:$0xff]
      %v946 = vld [vmem:[%s921 + $0x120] sm:$0xff]
      %v947 = vld [vmem:[%s921 + $0x128] sm:$0xff]
      %v948 = vld [vmem:[%s921 + $0x138] sm:$0xff]
      %v949 = vld [vmem:[%s921 + $0x140] sm:$0xff]
      %v950 = vld [vmem:[%s921 + $0x150] sm:$0xff]
      %v951 = vld [vmem:[%s921 + $0x158] sm:$0xff]
      %v952 = vld [vmem:[%s921 + $0x168] sm:$0xff]
      %v953 = vld [vmem:[%s921 + $0x170] sm:$0xff]
      %v954 = vlaneseq
      %v955 = vshrl.u32 %v954, 7
      %v956 = vsub.s32 6, %v955
      %v957 = vrot.slane %v319, %v956
      %v958 = vmul.f32 %v922, %v957
      %v959 = vmul.f32 %v923, %v957
      %v960 = vmul.f32 %v924, %v957
      %v961 = vmul.f32 %v925, %v957
      %v962 = vmul.f32 %v926, %v957
      %v963 = vmul.f32 %v927, %v957
      %v964 = vmul.f32 %v928, %v957
      %v965 = vmul.f32 %v929, %v957
      %v966 = vmul.f32 %v930, %v957
      %v967 = vmul.f32 %v931, %v957
      %v968 = vmul.f32 %v932, %v957
      %v969 = vmul.f32 %v933, %v957
      %v970 = vmul.f32 %v934, %v957
      %v971 = vmul.f32 %v935, %v957
      %v972 = vmul.f32 %v936, %v957
      %v973 = vmul.f32 %v937, %v957
      %v974 = vmul.f32 %v938, %v957
      %v975 = vmul.f32 %v939, %v957
      %v976 = vmul.f32 %v940, %v957
      %v977 = vmul.f32 %v941, %v957
      %v978 = vmul.f32 %v942, %v957
      %v979 = vmul.f32 %v943, %v957
      %v980 = vmul.f32 %v944, %v957
      %v981 = vmul.f32 %v945, %v957
      %v982 = vmul.f32 %v946, %v957
      %v983 = vmul.f32 %v947, %v957
      %v984 = vmul.f32 %v948, %v957
      %v985 = vmul.f32 %v949, %v957
      %v986 = vmul.f32 %v950, %v957
      %v987 = vmul.f32 %v951, %v957
      %v988 = vmul.f32 %v952, %v957
      %v989 = vmul.f32 %v953, %v957
      %v990 = vadd.f32 %v889, %v958
      %v991 = vadd.f32 %v890, %v959
      %v992 = vadd.f32 %v891, %v960
      %v993 = vadd.f32 %v892, %v961
      %v994 = vadd.f32 %v893, %v962
      %v995 = vadd.f32 %v894, %v963
      %v996 = vadd.f32 %v895, %v964
      %v997 = vadd.f32 %v896, %v965
      %v998 = vadd.f32 %v897, %v966
      %v999 = vadd.f32 %v898, %v967
      %v1000 = vadd.f32 %v899, %v968
      %v1001 = vadd.f32 %v900, %v969
      %v1002 = vadd.f32 %v901, %v970
      %v1003 = vadd.f32 %v902, %v971
      %v1004 = vadd.f32 %v903, %v972
      %v1005 = vadd.f32 %v904, %v973
      %v1006 = vadd.f32 %v905, %v974
      %v1007 = vadd.f32 %v906, %v975
      %v1008 = vadd.f32 %v907, %v976
      %v1009 = vadd.f32 %v908, %v977
      %v1010 = vadd.f32 %v909, %v978
      %v1011 = vadd.f32 %v910, %v979
      %v1012 = vadd.f32 %v911, %v980
      %v1013 = vadd.f32 %v912, %v981
      %v1014 = vadd.f32 %v913, %v982
      %v1015 = vadd.f32 %v914, %v983
      %v1016 = vadd.f32 %v915, %v984
      %v1017 = vadd.f32 %v916, %v985
      %v1018 = vadd.f32 %v917, %v986
      %v1019 = vadd.f32 %v918, %v987
      %v1020 = vadd.f32 %v919, %v988
      %v1021 = vadd.f32 %v920, %v989
      %v1022 = vld [vmem:[%s921 + $0x1] sm:$0xff]
      %v1023 = vld [vmem:[%s921 + $0x9] sm:$0xff]
      %v1024 = vld [vmem:[%s921 + $0x19] sm:$0xff]
      %v1025 = vld [vmem:[%s921 + $0x21] sm:$0xff]
      %v1026 = vld [vmem:[%s921 + $0x31] sm:$0xff]
      %v1027 = vld [vmem:[%s921 + $0x39] sm:$0xff]
      %v1028 = vld [vmem:[%s921 + $0x49] sm:$0xff]
      %v1029 = vld [vmem:[%s921 + $0x51] sm:$0xff]
      %v1030 = vld [vmem:[%s921 + $0x61] sm:$0xff]
      %v1031 = vld [vmem:[%s921 + $0x69] sm:$0xff]
      %v1032 = vld [vmem:[%s921 + $0x79] sm:$0xff]
      %v1033 = vld [vmem:[%s921 + $0x81] sm:$0xff]
      %v1034 = vld [vmem:[%s921 + $0x91] sm:$0xff]
      %v1035 = vld [vmem:[%s921 + $0x99] sm:$0xff]
      %v1036 = vld [vmem:[%s921 + $0xa9] sm:$0xff]
      %v1037 = vld [vmem:[%s921 + $0xb1] sm:$0xff]
      %v1038 = vld [vmem:[%s921 + $0xc1] sm:$0xff]
      %v1039 = vld [vmem:[%s921 + $0xc9] sm:$0xff]
      %v1040 = vld [vmem:[%s921 + $0xd9] sm:$0xff]
      %v1041 = vld [vmem:[%s921 + $0xe1] sm:$0xff]
      %v1042 = vld [vmem:[%s921 + $0xf1] sm:$0xff]
      %v1043 = vld [vmem:[%s921 + $0xf9] sm:$0xff]
      %v1044 = vld [vmem:[%s921 + $0x109] sm:$0xff]
      %v1045 = vld [vmem:[%s921 + $0x111] sm:$0xff]
      %v1046 = vld [vmem:[%s921 + $0x121] sm:$0xff]
      %v1047 = vld [vmem:[%s921 + $0x129] sm:$0xff]
      %v1048 = vld [vmem:[%s921 + $0x139] sm:$0xff]
      %v1049 = vld [vmem:[%s921 + $0x141] sm:$0xff]
      %v1050 = vld [vmem:[%s921 + $0x151] sm:$0xff]
      %v1051 = vld [vmem:[%s921 + $0x159] sm:$0xff]
      %v1052 = vld [vmem:[%s921 + $0x169] sm:$0xff]
      %v1053 = vld [vmem:[%s921 + $0x171] sm:$0xff]
      %v1054 = vlaneseq
      %v1055 = vshrl.u32 %v1054, 7
      %v1056 = vsub.s32 7, %v1055
      %v1057 = vrot.slane %v319, %v1056
      %v1058 = vmul.f32 %v1022, %v1057
      %v1059 = vmul.f32 %v1023, %v1057
      %v1060 = vmul.f32 %v1024, %v1057
      %v1061 = vmul.f32 %v1025, %v1057
      %v1062 = vmul.f32 %v1026, %v1057
      %v1063 = vmul.f32 %v1027, %v1057
      %v1064 = vmul.f32 %v1028, %v1057
      %v1065 = vmul.f32 %v1029, %v1057
      %v1066 = vmul.f32 %v1030, %v1057
      %v1067 = vmul.f32 %v1031, %v1057
      %v1068 = vmul.f32 %v1032, %v1057
      %v1069 = vmul.f32 %v1033, %v1057
      %v1070 = vmul.f32 %v1034, %v1057
      %v1071 = vmul.f32 %v1035, %v1057
      %v1072 = vmul.f32 %v1036, %v1057
      %v1073 = vmul.f32 %v1037, %v1057
      %v1074 = vmul.f32 %v1038, %v1057
      %v1075 = vmul.f32 %v1039, %v1057
      %v1076 = vmul.f32 %v1040, %v1057
      %v1077 = vmul.f32 %v1041, %v1057
      %v1078 = vmul.f32 %v1042, %v1057
      %v1079 = vmul.f32 %v1043, %v1057
      %v1080 = vmul.f32 %v1044, %v1057
      %v1081 = vmul.f32 %v1045, %v1057
      %v1082 = vmul.f32 %v1046, %v1057
      %v1083 = vmul.f32 %v1047, %v1057
      %v1084 = vmul.f32 %v1048, %v1057
      %v1085 = vmul.f32 %v1049, %v1057
      %v1086 = vmul.f32 %v1050, %v1057
      %v1087 = vmul.f32 %v1051, %v1057
      %v1088 = vmul.f32 %v1052, %v1057
      %v1089 = vmul.f32 %v1053, %v1057
      %v1090 = vadd.f32 %v990, %v1058
      %v1091 = vadd.f32 %v991, %v1059
      %v1092 = vadd.f32 %v992, %v1060
      %v1093 = vadd.f32 %v993, %v1061
      %v1094 = vadd.f32 %v994, %v1062
      %v1095 = vadd.f32 %v995, %v1063
      %v1096 = vadd.f32 %v996, %v1064
      %v1097 = vadd.f32 %v997, %v1065
      %v1098 = vadd.f32 %v998, %v1066
      %v1099 = vadd.f32 %v999, %v1067
      %v1100 = vadd.f32 %v1000, %v1068
      %v1101 = vadd.f32 %v1001, %v1069
      %v1102 = vadd.f32 %v1002, %v1070
      %v1103 = vadd.f32 %v1003, %v1071
      %v1104 = vadd.f32 %v1004, %v1072
      %v1105 = vadd.f32 %v1005, %v1073
      %v1106 = vadd.f32 %v1006, %v1074
      %v1107 = vadd.f32 %v1007, %v1075
      %v1108 = vadd.f32 %v1008, %v1076
      %v1109 = vadd.f32 %v1009, %v1077
      %v1110 = vadd.f32 %v1010, %v1078
      %v1111 = vadd.f32 %v1011, %v1079
      %v1112 = vadd.f32 %v1012, %v1080
      %v1113 = vadd.f32 %v1013, %v1081
      %v1114 = vadd.f32 %v1014, %v1082
      %v1115 = vadd.f32 %v1015, %v1083
      %v1116 = vadd.f32 %v1016, %v1084
      %v1117 = vadd.f32 %v1017, %v1085
      %v1118 = vadd.f32 %v1018, %v1086
      %v1119 = vadd.f32 %v1019, %v1087
      %v1120 = vadd.f32 %v1020, %v1088
      %v1121 = vadd.f32 %v1021, %v1089
      %v1122 = vld [vmem:[%s921 + $0x2] sm:$0xff]
      %v1123 = vld [vmem:[%s921 + $0xa] sm:$0xff]
      %v1124 = vld [vmem:[%s921 + $0x1a] sm:$0xff]
      %v1125 = vld [vmem:[%s921 + $0x22] sm:$0xff]
      %v1126 = vld [vmem:[%s921 + $0x32] sm:$0xff]
      %v1127 = vld [vmem:[%s921 + $0x3a] sm:$0xff]
      %v1128 = vld [vmem:[%s921 + $0x4a] sm:$0xff]
      %v1129 = vld [vmem:[%s921 + $0x52] sm:$0xff]
      %v1130 = vld [vmem:[%s921 + $0x62] sm:$0xff]
      %v1131 = vld [vmem:[%s921 + $0x6a] sm:$0xff]
      %v1132 = vld [vmem:[%s921 + $0x7a] sm:$0xff]
      %v1133 = vld [vmem:[%s921 + $0x82] sm:$0xff]
      %v1134 = vld [vmem:[%s921 + $0x92] sm:$0xff]
      %v1135 = vld [vmem:[%s921 + $0x9a] sm:$0xff]
      %v1136 = vld [vmem:[%s921 + $0xaa] sm:$0xff]
      %v1137 = vld [vmem:[%s921 + $0xb2] sm:$0xff]
      %v1138 = vld [vmem:[%s921 + $0xc2] sm:$0xff]
      %v1139 = vld [vmem:[%s921 + $0xca] sm:$0xff]
      %v1140 = vld [vmem:[%s921 + $0xda] sm:$0xff]
      %v1141 = vld [vmem:[%s921 + $0xe2] sm:$0xff]
      %v1142 = vld [vmem:[%s921 + $0xf2] sm:$0xff]
      %v1143 = vld [vmem:[%s921 + $0xfa] sm:$0xff]
      %v1144 = vld [vmem:[%s921 + $0x10a] sm:$0xff]
      %v1145 = vld [vmem:[%s921 + $0x112] sm:$0xff]
      %v1146 = vld [vmem:[%s921 + $0x122] sm:$0xff]
      %v1147 = vld [vmem:[%s921 + $0x12a] sm:$0xff]
      %v1148 = vld [vmem:[%s921 + $0x13a] sm:$0xff]
      %v1149 = vld [vmem:[%s921 + $0x142] sm:$0xff]
      %v1150 = vld [vmem:[%s921 + $0x152] sm:$0xff]
      %v1151 = vld [vmem:[%s921 + $0x15a] sm:$0xff]
      %v1152 = vld [vmem:[%s921 + $0x16a] sm:$0xff]
      %v1153 = vld [vmem:[%s921 + $0x172] sm:$0xff]
      %v1154 = vlaneseq
      %v1155 = vshrl.u32 %v1154, 7
      %v1156 = vsub.s32 0, %v1155
      %v1157 = vrot.slane %v320, %v1156
      %v1158 = vmul.f32 %v1122, %v1157
      %v1159 = vmul.f32 %v1123, %v1157
      %v1160 = vmul.f32 %v1124, %v1157
      %v1161 = vmul.f32 %v1125, %v1157
      %v1162 = vmul.f32 %v1126, %v1157
      %v1163 = vmul.f32 %v1127, %v1157
      %v1164 = vmul.f32 %v1128, %v1157
      %v1165 = vmul.f32 %v1129, %v1157
      %v1166 = vmul.f32 %v1130, %v1157
      %v1167 = vmul.f32 %v1131, %v1157
      %v1168 = vmul.f32 %v1132, %v1157
      %v1169 = vmul.f32 %v1133, %v1157
      %v1170 = vmul.f32 %v1134, %v1157
      %v1171 = vmul.f32 %v1135, %v1157
      %v1172 = vmul.f32 %v1136, %v1157
      %v1173 = vmul.f32 %v1137, %v1157
      %v1174 = vmul.f32 %v1138, %v1157
      %v1175 = vmul.f32 %v1139, %v1157
      %v1176 = vmul.f32 %v1140, %v1157
      %v1177 = vmul.f32 %v1141, %v1157
      %v1178 = vmul.f32 %v1142, %v1157
      %v1179 = vmul.f32 %v1143, %v1157
      %v1180 = vmul.f32 %v1144, %v1157
      %v1181 = vmul.f32 %v1145, %v1157
      %v1182 = vmul.f32 %v1146, %v1157
      %v1183 = vmul.f32 %v1147, %v1157
      %v1184 = vmul.f32 %v1148, %v1157
      %v1185 = vmul.f32 %v1149, %v1157
      %v1186 = vmul.f32 %v1150, %v1157
      %v1187 = vmul.f32 %v1151, %v1157
      %v1188 = vmul.f32 %v1152, %v1157
      %v1189 = vmul.f32 %v1153, %v1157
      %v1190 = vadd.f32 %v1090, %v1158
      %v1191 = vadd.f32 %v1091, %v1159
      %v1192 = vadd.f32 %v1092, %v1160
      %v1193 = vadd.f32 %v1093, %v1161
      %v1194 = vadd.f32 %v1094, %v1162
      %v1195 = vadd.f32 %v1095, %v1163
      %v1196 = vadd.f32 %v1096, %v1164
      %v1197 = vadd.f32 %v1097, %v1165
      %v1198 = vadd.f32 %v1098, %v1166
      %v1199 = vadd.f32 %v1099, %v1167
      %v1200 = vadd.f32 %v1100, %v1168
      %v1201 = vadd.f32 %v1101, %v1169
      %v1202 = vadd.f32 %v1102, %v1170
      %v1203 = vadd.f32 %v1103, %v1171
      %v1204 = vadd.f32 %v1104, %v1172
      %v1205 = vadd.f32 %v1105, %v1173
      %v1206 = vadd.f32 %v1106, %v1174
      %v1207 = vadd.f32 %v1107, %v1175
      %v1208 = vadd.f32 %v1108, %v1176
      %v1209 = vadd.f32 %v1109, %v1177
      %v1210 = vadd.f32 %v1110, %v1178
      %v1211 = vadd.f32 %v1111, %v1179
      %v1212 = vadd.f32 %v1112, %v1180
      %v1213 = vadd.f32 %v1113, %v1181
      %v1214 = vadd.f32 %v1114, %v1182
      %v1215 = vadd.f32 %v1115, %v1183
      %v1216 = vadd.f32 %v1116, %v1184
      %v1217 = vadd.f32 %v1117, %v1185
      %v1218 = vadd.f32 %v1118, %v1186
      %v1219 = vadd.f32 %v1119, %v1187
      %v1220 = vadd.f32 %v1120, %v1188
      %v1221 = vadd.f32 %v1121, %v1189
      %v1222 = vld [vmem:[%s2] sm:$0xf]
      %v1223 = vld [vmem:[%s3] sm:$0x1]
      %1225 = vset.pattern.permute.xlu0 0
      %1226 = vperm.xlu0 %1225, %v1190
      %v1227 = vpop.permute.xlu0 %1226
      %1230 = vset.pattern.permute.xlu0 0
      %1231 = vperm.xlu0 %1230, %v1191
      %v1232 = vpop.permute.xlu0 %1231
      %1235 = vset.pattern.permute.xlu0 0
      %1236 = vperm.xlu0 %1235, %v1192
      %v1237 = vpop.permute.xlu0 %1236
      %1240 = vset.pattern.permute.xlu0 0
      %1241 = vperm.xlu0 %1240, %v1193
      %v1242 = vpop.permute.xlu0 %1241
      %1245 = vset.pattern.permute.xlu0 0
      %1246 = vperm.xlu0 %1245, %v1194
      %v1247 = vpop.permute.xlu0 %1246
      %1250 = vset.pattern.permute.xlu0 0
      %1251 = vperm.xlu0 %1250, %v1195
      %v1252 = vpop.permute.xlu0 %1251
      %1255 = vset.pattern.permute.xlu0 0
      %1256 = vperm.xlu0 %1255, %v1196
      %v1257 = vpop.permute.xlu0 %1256
      %1260 = vset.pattern.permute.xlu0 0
      %1261 = vperm.xlu0 %1260, %v1197
      %v1262 = vpop.permute.xlu0 %1261
      %1265 = vset.pattern.permute.xlu0 0
      %1266 = vperm.xlu0 %1265, %v1198
      %v1267 = vpop.permute.xlu0 %1266
      %1270 = vset.pattern.permute.xlu0 0
      %1271 = vperm.xlu0 %1270, %v1199
      %v1272 = vpop.permute.xlu0 %1271
      %1275 = vset.pattern.permute.xlu0 0
      %1276 = vperm.xlu0 %1275, %v1200
      %v1277 = vpop.permute.xlu0 %1276
      %1280 = vset.pattern.permute.xlu0 0
      %1281 = vperm.xlu0 %1280, %v1201
      %v1282 = vpop.permute.xlu0 %1281
      %1285 = vset.pattern.permute.xlu0 0
      %1286 = vperm.xlu0 %1285, %v1202
      %v1287 = vpop.permute.xlu0 %1286
      %1290 = vset.pattern.permute.xlu0 0
      %1291 = vperm.xlu0 %1290, %v1203
      %v1292 = vpop.permute.xlu0 %1291
      %1295 = vset.pattern.permute.xlu0 0
      %1296 = vperm.xlu0 %1295, %v1204
      %v1297 = vpop.permute.xlu0 %1296
      %1300 = vset.pattern.permute.xlu0 0
      %1301 = vperm.xlu0 %1300, %v1205
      %v1302 = vpop.permute.xlu0 %1301
      %1305 = vset.pattern.permute.xlu0 0
      %1306 = vperm.xlu0 %1305, %v1206
      %v1307 = vpop.permute.xlu0 %1306
      %1310 = vset.pattern.permute.xlu0 0
      %1311 = vperm.xlu0 %1310, %v1207
      %v1312 = vpop.permute.xlu0 %1311
      %1315 = vset.pattern.permute.xlu0 0
      %1316 = vperm.xlu0 %1315, %v1208
      %v1317 = vpop.permute.xlu0 %1316
      %1320 = vset.pattern.permute.xlu0 0
      %1321 = vperm.xlu0 %1320, %v1209
      %v1322 = vpop.permute.xlu0 %1321
      %1325 = vset.pattern.permute.xlu0 0
      %1326 = vperm.xlu0 %1325, %v1210
      %v1327 = vpop.permute.xlu0 %1326
      %1330 = vset.pattern.permute.xlu0 0
      %1331 = vperm.xlu0 %1330, %v1211
      %v1332 = vpop.permute.xlu0 %1331
      %1335 = vset.pattern.permute.xlu0 0
      %1336 = vperm.xlu0 %1335, %v1212
      %v1337 = vpop.permute.xlu0 %1336
      %1340 = vset.pattern.permute.xlu0 0
      %1341 = vperm.xlu0 %1340, %v1213
      %v1342 = vpop.permute.xlu0 %1341
      %1345 = vset.pattern.permute.xlu0 0
      %1346 = vperm.xlu0 %1345, %v1214
      %v1347 = vpop.permute.xlu0 %1346
      %1350 = vset.pattern.permute.xlu0 0
      %1351 = vperm.xlu0 %1350, %v1215
      %v1352 = vpop.permute.xlu0 %1351
      %1355 = vset.pattern.permute.xlu0 0
      %1356 = vperm.xlu0 %1355, %v1216
      %v1357 = vpop.permute.xlu0 %1356
      %1360 = vset.pattern.permute.xlu0 0
      %1361 = vperm.xlu0 %1360, %v1217
      %v1362 = vpop.permute.xlu0 %1361
      %1365 = vset.pattern.permute.xlu0 0
      %1366 = vperm.xlu0 %1365, %v1218
      %v1367 = vpop.permute.xlu0 %1366
      %1370 = vset.pattern.permute.xlu0 0
      %1371 = vperm.xlu0 %1370, %v1219
      %v1372 = vpop.permute.xlu0 %1371
      %1375 = vset.pattern.permute.xlu0 0
      %1376 = vperm.xlu0 %1375, %v1220
      %v1377 = vpop.permute.xlu0 %1376
      %1380 = vset.pattern.permute.xlu0 0
      %1381 = vperm.xlu0 %1380, %v1221
      %v1382 = vpop.permute.xlu0 %1381
      %v1384 = vlaneseq
      %v1385 = vshrl.u32 %v1384, 7
      %v1386 = vsub.s32 0, %v1385
      %v1387 = vrot.slane %v1222, %v1386
      %v1388 = vmul.f32 %v1227, %v1387
      %v1389 = vmul.f32 %v1232, %v1387
      %v1390 = vmul.f32 %v1237, %v1387
      %v1391 = vmul.f32 %v1242, %v1387
      %v1392 = vmul.f32 %v1247, %v1387
      %v1393 = vmul.f32 %v1252, %v1387
      %v1394 = vmul.f32 %v1257, %v1387
      %v1395 = vmul.f32 %v1262, %v1387
      %v1396 = vmul.f32 %v1267, %v1387
      %v1397 = vmul.f32 %v1272, %v1387
      %v1398 = vmul.f32 %v1277, %v1387
      %v1399 = vmul.f32 %v1282, %v1387
      %v1400 = vmul.f32 %v1287, %v1387
      %v1401 = vmul.f32 %v1292, %v1387
      %v1402 = vmul.f32 %v1297, %v1387
      %v1403 = vmul.f32 %v1302, %v1387
      %v1404 = vmul.f32 %v1307, %v1387
      %v1405 = vmul.f32 %v1312, %v1387
      %v1406 = vmul.f32 %v1317, %v1387
      %v1407 = vmul.f32 %v1322, %v1387
      %v1408 = vmul.f32 %v1327, %v1387
      %v1409 = vmul.f32 %v1332, %v1387
      %v1410 = vmul.f32 %v1337, %v1387
      %v1411 = vmul.f32 %v1342, %v1387
      %v1412 = vmul.f32 %v1347, %v1387
      %v1413 = vmul.f32 %v1352, %v1387
      %v1414 = vmul.f32 %v1357, %v1387
      %v1415 = vmul.f32 %v1362, %v1387
      %v1416 = vmul.f32 %v1367, %v1387
      %v1417 = vmul.f32 %v1372, %v1387
      %v1418 = vmul.f32 %v1377, %v1387
      %v1419 = vmul.f32 %v1382, %v1387
      %v1420 = vadd.f32 %v1388, 0.0
      %v1421 = vadd.f32 %v1389, 0.0
      %v1422 = vadd.f32 %v1390, 0.0
      %v1423 = vadd.f32 %v1391, 0.0
      %v1424 = vadd.f32 %v1392, 0.0
      %v1425 = vadd.f32 %v1393, 0.0
      %v1426 = vadd.f32 %v1394, 0.0
      %v1427 = vadd.f32 %v1395, 0.0
      %v1428 = vadd.f32 %v1396, 0.0
      %v1429 = vadd.f32 %v1397, 0.0
      %v1430 = vadd.f32 %v1398, 0.0
      %v1431 = vadd.f32 %v1399, 0.0
      %v1432 = vadd.f32 %v1400, 0.0
      %v1433 = vadd.f32 %v1401, 0.0
      %v1434 = vadd.f32 %v1402, 0.0
      %v1435 = vadd.f32 %v1403, 0.0
      %v1436 = vadd.f32 %v1404, 0.0
      %v1437 = vadd.f32 %v1405, 0.0
      %v1438 = vadd.f32 %v1406, 0.0
      %v1439 = vadd.f32 %v1407, 0.0
      %v1440 = vadd.f32 %v1408, 0.0
      %v1441 = vadd.f32 %v1409, 0.0
      %v1442 = vadd.f32 %v1410, 0.0
      %v1443 = vadd.f32 %v1411, 0.0
      %v1444 = vadd.f32 %v1412, 0.0
      %v1445 = vadd.f32 %v1413, 0.0
      %v1446 = vadd.f32 %v1414, 0.0
      %v1447 = vadd.f32 %v1415, 0.0
      %v1448 = vadd.f32 %v1416, 0.0
      %v1449 = vadd.f32 %v1417, 0.0
      %v1450 = vadd.f32 %v1418, 0.0
      %v1451 = vadd.f32 %v1419, 0.0
      %1452 = vset.pattern.permute.xlu0 1
      %1453 = vperm.xlu0 %1452, %v1190
      %v1454 = vpop.permute.xlu0 %1453
      %1456 = vset.pattern.permute.xlu0 1
      %1457 = vperm.xlu0 %1456, %v1191
      %v1458 = vpop.permute.xlu0 %1457
      %1460 = vset.pattern.permute.xlu0 1
      %1461 = vperm.xlu0 %1460, %v1192
      %v1462 = vpop.permute.xlu0 %1461
      %1464 = vset.pattern.permute.xlu0 1
      %1465 = vperm.xlu0 %1464, %v1193
      %v1466 = vpop.permute.xlu0 %1465
      %1468 = vset.pattern.permute.xlu0 1
      %1469 = vperm.xlu0 %1468, %v1194
      %v1470 = vpop.permute.xlu0 %1469
      %1472 = vset.pattern.permute.xlu0 1
      %1473 = vperm.xlu0 %1472, %v1195
      %v1474 = vpop.permute.xlu0 %1473
      %1476 = vset.pattern.permute.xlu0 1
      %1477 = vperm.xlu0 %1476, %v1196
      %v1478 = vpop.permute.xlu0 %1477
      %1480 = vset.pattern.permute.xlu0 1
      %1481 = vperm.xlu0 %1480, %v1197
      %v1482 = vpop.permute.xlu0 %1481
      %1484 = vset.pattern.permute.xlu0 1
      %1485 = vperm.xlu0 %1484, %v1198
      %v1486 = vpop.permute.xlu0 %1485
      %1488 = vset.pattern.permute.xlu0 1
      %1489 = vperm.xlu0 %1488, %v1199
      %v1490 = vpop.permute.xlu0 %1489
      %1492 = vset.pattern.permute.xlu0 1
      %1493 = vperm.xlu0 %1492, %v1200
      %v1494 = vpop.permute.xlu0 %1493
      %1496 = vset.pattern.permute.xlu0 1
      %1497 = vperm.xlu0 %1496, %v1201
      %v1498 = vpop.permute.xlu0 %1497
      %1500 = vset.pattern.permute.xlu0 1
      %1501 = vperm.xlu0 %1500, %v1202
      %v1502 = vpop.permute.xlu0 %1501
      %1504 = vset.pattern.permute.xlu0 1
      %1505 = vperm.xlu0 %1504, %v1203
      %v1506 = vpop.permute.xlu0 %1505
      %1508 = vset.pattern.permute.xlu0 1
      %1509 = vperm.xlu0 %1508, %v1204
      %v1510 = vpop.permute.xlu0 %1509
      %1512 = vset.pattern.permute.xlu0 1
      %1513 = vperm.xlu0 %1512, %v1205
      %v1514 = vpop.permute.xlu0 %1513
      %1516 = vset.pattern.permute.xlu0 1
      %1517 = vperm.xlu0 %1516, %v1206
      %v1518 = vpop.permute.xlu0 %1517
      %1520 = vset.pattern.permute.xlu0 1
      %1521 = vperm.xlu0 %1520, %v1207
      %v1522 = vpop.permute.xlu0 %1521
      %1524 = vset.pattern.permute.xlu0 1
      %1525 = vperm.xlu0 %1524, %v1208
      %v1526 = vpop.permute.xlu0 %1525
      %1528 = vset.pattern.permute.xlu0 1
      %1529 = vperm.xlu0 %1528, %v1209
      %v1530 = vpop.permute.xlu0 %1529
      %1532 = vset.pattern.permute.xlu0 1
      %1533 = vperm.xlu0 %1532, %v1210
      %v1534 = vpop.permute.xlu0 %1533
      %1536 = vset.pattern.permute.xlu0 1
      %1537 = vperm.xlu0 %1536, %v1211
      %v1538 = vpop.permute.xlu0 %1537
      %1540 = vset.pattern.permute.xlu0 1
      %1541 = vperm.xlu0 %1540, %v1212
      %v1542 = vpop.permute.xlu0 %1541
      %1544 = vset.pattern.permute.xlu0 1
      %1545 = vperm.xlu0 %1544, %v1213
      %v1546 = vpop.permute.xlu0 %1545
      %1548 = vset.pattern.permute.xlu0 1
      %1549 = vperm.xlu0 %1548, %v1214
      %v1550 = vpop.permute.xlu0 %1549
      %1552 = vset.pattern.permute.xlu0 1
      %1553 = vperm.xlu0 %1552, %v1215
      %v1554 = vpop.permute.xlu0 %1553
      %1556 = vset.pattern.permute.xlu0 1
      %1557 = vperm.xlu0 %1556, %v1216
      %v1558 = vpop.permute.xlu0 %1557
      %1560 = vset.pattern.permute.xlu0 1
      %1561 = vperm.xlu0 %1560, %v1217
      %v1562 = vpop.permute.xlu0 %1561
      %1564 = vset.pattern.permute.xlu0 1
      %1565 = vperm.xlu0 %1564, %v1218
      %v1566 = vpop.permute.xlu0 %1565
      %1568 = vset.pattern.permute.xlu0 1
      %1569 = vperm.xlu0 %1568, %v1219
      %v1570 = vpop.permute.xlu0 %1569
      %1572 = vset.pattern.permute.xlu0 1
      %1573 = vperm.xlu0 %1572, %v1220
      %v1574 = vpop.permute.xlu0 %1573
      %1576 = vset.pattern.permute.xlu0 1
      %1577 = vperm.xlu0 %1576, %v1221
      %v1578 = vpop.permute.xlu0 %1577
      %v1580 = vlaneseq
      %v1581 = vshrl.u32 %v1580, 7
      %v1582 = vsub.s32 1, %v1581
      %v1583 = vrot.slane %v1222, %v1582
      %v1584 = vmul.f32 %v1454, %v1583
      %v1585 = vmul.f32 %v1458, %v1583
      %v1586 = vmul.f32 %v1462, %v1583
      %v1587 = vmul.f32 %v1466, %v1583
      %v1588 = vmul.f32 %v1470, %v1583
      %v1589 = vmul.f32 %v1474, %v1583
      %v1590 = vmul.f32 %v1478, %v1583
      %v1591 = vmul.f32 %v1482, %v1583
      %v1592 = vmul.f32 %v1486, %v1583
      %v1593 = vmul.f32 %v1490, %v1583
      %v1594 = vmul.f32 %v1494, %v1583
      %v1595 = vmul.f32 %v1498, %v1583
      %v1596 = vmul.f32 %v1502, %v1583
      %v1597 = vmul.f32 %v1506, %v1583
      %v1598 = vmul.f32 %v1510, %v1583
      %v1599 = vmul.f32 %v1514, %v1583
      %v1600 = vmul.f32 %v1518, %v1583
      %v1601 = vmul.f32 %v1522, %v1583
      %v1602 = vmul.f32 %v1526, %v1583
      %v1603 = vmul.f32 %v1530, %v1583
      %v1604 = vmul.f32 %v1534, %v1583
      %v1605 = vmul.f32 %v1538, %v1583
      %v1606 = vmul.f32 %v1542, %v1583
      %v1607 = vmul.f32 %v1546, %v1583
      %v1608 = vmul.f32 %v1550, %v1583
      %v1609 = vmul.f32 %v1554, %v1583
      %v1610 = vmul.f32 %v1558, %v1583
      %v1611 = vmul.f32 %v1562, %v1583
      %v1612 = vmul.f32 %v1566, %v1583
      %v1613 = vmul.f32 %v1570, %v1583
      %v1614 = vmul.f32 %v1574, %v1583
      %v1615 = vmul.f32 %v1578, %v1583
      %v1616 = vadd.f32 %v1420, %v1584
      %v1617 = vadd.f32 %v1421, %v1585
      %v1618 = vadd.f32 %v1422, %v1586
      %v1619 = vadd.f32 %v1423, %v1587
      %v1620 = vadd.f32 %v1424, %v1588
      %v1621 = vadd.f32 %v1425, %v1589
      %v1622 = vadd.f32 %v1426, %v1590
      %v1623 = vadd.f32 %v1427, %v1591
      %v1624 = vadd.f32 %v1428, %v1592
      %v1625 = vadd.f32 %v1429, %v1593
      %v1626 = vadd.f32 %v1430, %v1594
      %v1627 = vadd.f32 %v1431, %v1595
      %v1628 = vadd.f32 %v1432, %v1596
      %v1629 = vadd.f32 %v1433, %v1597
      %v1630 = vadd.f32 %v1434, %v1598
      %v1631 = vadd.f32 %v1435, %v1599
      %v1632 = vadd.f32 %v1436, %v1600
      %v1633 = vadd.f32 %v1437, %v1601
      %v1634 = vadd.f32 %v1438, %v1602
      %v1635 = vadd.f32 %v1439, %v1603
      %v1636 = vadd.f32 %v1440, %v1604
      %v1637 = vadd.f32 %v1441, %v1605
      %v1638 = vadd.f32 %v1442, %v1606
      %v1639 = vadd.f32 %v1443, %v1607
      %v1640 = vadd.f32 %v1444, %v1608
      %v1641 = vadd.f32 %v1445, %v1609
      %v1642 = vadd.f32 %v1446, %v1610
      %v1643 = vadd.f32 %v1447, %v1611
      %v1644 = vadd.f32 %v1448, %v1612
      %v1645 = vadd.f32 %v1449, %v1613
      %v1646 = vadd.f32 %v1450, %v1614
      %v1647 = vadd.f32 %v1451, %v1615
      %1648 = vset.pattern.permute.xlu0 2
      %1649 = vperm.xlu0 %1648, %v1190
      %v1650 = vpop.permute.xlu0 %1649
      %1652 = vset.pattern.permute.xlu0 2
      %1653 = vperm.xlu0 %1652, %v1191
      %v1654 = vpop.permute.xlu0 %1653
      %1656 = vset.pattern.permute.xlu0 2
      %1657 = vperm.xlu0 %1656, %v1192
      %v1658 = vpop.permute.xlu0 %1657
      %1660 = vset.pattern.permute.xlu0 2
      %1661 = vperm.xlu0 %1660, %v1193
      %v1662 = vpop.permute.xlu0 %1661
      %1664 = vset.pattern.permute.xlu0 2
      %1665 = vperm.xlu0 %1664, %v1194
      %v1666 = vpop.permute.xlu0 %1665
      %1668 = vset.pattern.permute.xlu0 2
      %1669 = vperm.xlu0 %1668, %v1195
      %v1670 = vpop.permute.xlu0 %1669
      %1672 = vset.pattern.permute.xlu0 2
      %1673 = vperm.xlu0 %1672, %v1196
      %v1674 = vpop.permute.xlu0 %1673
      %1676 = vset.pattern.permute.xlu0 2
      %1677 = vperm.xlu0 %1676, %v1197
      %v1678 = vpop.permute.xlu0 %1677
      %1680 = vset.pattern.permute.xlu0 2
      %1681 = vperm.xlu0 %1680, %v1198
      %v1682 = vpop.permute.xlu0 %1681
      %1684 = vset.pattern.permute.xlu0 2
      %1685 = vperm.xlu0 %1684, %v1199
      %v1686 = vpop.permute.xlu0 %1685
      %1688 = vset.pattern.permute.xlu0 2
      %1689 = vperm.xlu0 %1688, %v1200
      %v1690 = vpop.permute.xlu0 %1689
      %1692 = vset.pattern.permute.xlu0 2
      %1693 = vperm.xlu0 %1692, %v1201
      %v1694 = vpop.permute.xlu0 %1693
      %1696 = vset.pattern.permute.xlu0 2
      %1697 = vperm.xlu0 %1696, %v1202
      %v1698 = vpop.permute.xlu0 %1697
      %1700 = vset.pattern.permute.xlu0 2
      %1701 = vperm.xlu0 %1700, %v1203
      %v1702 = vpop.permute.xlu0 %1701
      %1704 = vset.pattern.permute.xlu0 2
      %1705 = vperm.xlu0 %1704, %v1204
      %v1706 = vpop.permute.xlu0 %1705
      %1708 = vset.pattern.permute.xlu0 2
      %1709 = vperm.xlu0 %1708, %v1205
      %v1710 = vpop.permute.xlu0 %1709
      %1712 = vset.pattern.permute.xlu0 2
      %1713 = vperm.xlu0 %1712, %v1206
      %v1714 = vpop.permute.xlu0 %1713
      %1716 = vset.pattern.permute.xlu0 2
      %1717 = vperm.xlu0 %1716, %v1207
      %v1718 = vpop.permute.xlu0 %1717
      %1720 = vset.pattern.permute.xlu0 2
      %1721 = vperm.xlu0 %1720, %v1208
      %v1722 = vpop.permute.xlu0 %1721
      %1724 = vset.pattern.permute.xlu0 2
      %1725 = vperm.xlu0 %1724, %v1209
      %v1726 = vpop.permute.xlu0 %1725
      %1728 = vset.pattern.permute.xlu0 2
      %1729 = vperm.xlu0 %1728, %v1210
      %v1730 = vpop.permute.xlu0 %1729
      %1732 = vset.pattern.permute.xlu0 2
      %1733 = vperm.xlu0 %1732, %v1211
      %v1734 = vpop.permute.xlu0 %1733
      %1736 = vset.pattern.permute.xlu0 2
      %1737 = vperm.xlu0 %1736, %v1212
      %v1738 = vpop.permute.xlu0 %1737
      %1740 = vset.pattern.permute.xlu0 2
      %1741 = vperm.xlu0 %1740, %v1213
      %v1742 = vpop.permute.xlu0 %1741
      %1744 = vset.pattern.permute.xlu0 2
      %1745 = vperm.xlu0 %1744, %v1214
      %v1746 = vpop.permute.xlu0 %1745
      %1748 = vset.pattern.permute.xlu0 2
      %1749 = vperm.xlu0 %1748, %v1215
      %v1750 = vpop.permute.xlu0 %1749
      %1752 = vset.pattern.permute.xlu0 2
      %1753 = vperm.xlu0 %1752, %v1216
      %v1754 = vpop.permute.xlu0 %1753
      %1756 = vset.pattern.permute.xlu0 2
      %1757 = vperm.xlu0 %1756, %v1217
      %v1758 = vpop.permute.xlu0 %1757
      %1760 = vset.pattern.permute.xlu0 2
      %1761 = vperm.xlu0 %1760, %v1218
      %v1762 = vpop.permute.xlu0 %1761
      %1764 = vset.pattern.permute.xlu0 2
      %1765 = vperm.xlu0 %1764, %v1219
      %v1766 = vpop.permute.xlu0 %1765
      %1768 = vset.pattern.permute.xlu0 2
      %1769 = vperm.xlu0 %1768, %v1220
      %v1770 = vpop.permute.xlu0 %1769
      %1772 = vset.pattern.permute.xlu0 2
      %1773 = vperm.xlu0 %1772, %v1221
      %v1774 = vpop.permute.xlu0 %1773
      %v1776 = vlaneseq
      %v1777 = vshrl.u32 %v1776, 7
      %v1778 = vsub.s32 2, %v1777
      %v1779 = vrot.slane %v1222, %v1778
      %v1780 = vmul.f32 %v1650, %v1779
      %v1781 = vmul.f32 %v1654, %v1779
      %v1782 = vmul.f32 %v1658, %v1779
      %v1783 = vmul.f32 %v1662, %v1779
      %v1784 = vmul.f32 %v1666, %v1779
      %v1785 = vmul.f32 %v1670, %v1779
      %v1786 = vmul.f32 %v1674, %v1779
      %v1787 = vmul.f32 %v1678, %v1779
      %v1788 = vmul.f32 %v1682, %v1779
      %v1789 = vmul.f32 %v1686, %v1779
      %v1790 = vmul.f32 %v1690, %v1779
      %v1791 = vmul.f32 %v1694, %v1779
      %v1792 = vmul.f32 %v1698, %v1779
      %v1793 = vmul.f32 %v1702, %v1779
      %v1794 = vmul.f32 %v1706, %v1779
      %v1795 = vmul.f32 %v1710, %v1779
      %v1796 = vmul.f32 %v1714, %v1779
      %v1797 = vmul.f32 %v1718, %v1779
      %v1798 = vmul.f32 %v1722, %v1779
      %v1799 = vmul.f32 %v1726, %v1779
      %v1800 = vmul.f32 %v1730, %v1779
      %v1801 = vmul.f32 %v1734, %v1779
      %v1802 = vmul.f32 %v1738, %v1779
      %v1803 = vmul.f32 %v1742, %v1779
      %v1804 = vmul.f32 %v1746, %v1779
      %v1805 = vmul.f32 %v1750, %v1779
      %v1806 = vmul.f32 %v1754, %v1779
      %v1807 = vmul.f32 %v1758, %v1779
      %v1808 = vmul.f32 %v1762, %v1779
      %v1809 = vmul.f32 %v1766, %v1779
      %v1810 = vmul.f32 %v1770, %v1779
      %v1811 = vmul.f32 %v1774, %v1779
      %v1812 = vadd.f32 %v1616, %v1780
      %v1813 = vadd.f32 %v1617, %v1781
      %v1814 = vadd.f32 %v1618, %v1782
      %v1815 = vadd.f32 %v1619, %v1783
      %v1816 = vadd.f32 %v1620, %v1784
      %v1817 = vadd.f32 %v1621, %v1785
      %v1818 = vadd.f32 %v1622, %v1786
      %v1819 = vadd.f32 %v1623, %v1787
      %v1820 = vadd.f32 %v1624, %v1788
      %v1821 = vadd.f32 %v1625, %v1789
      %v1822 = vadd.f32 %v1626, %v1790
      %v1823 = vadd.f32 %v1627, %v1791
      %v1824 = vadd.f32 %v1628, %v1792
      %v1825 = vadd.f32 %v1629, %v1793
      %v1826 = vadd.f32 %v1630, %v1794
      %v1827 = vadd.f32 %v1631, %v1795
      %v1828 = vadd.f32 %v1632, %v1796
      %v1829 = vadd.f32 %v1633, %v1797
      %v1830 = vadd.f32 %v1634, %v1798
      %v1831 = vadd.f32 %v1635, %v1799
      %v1832 = vadd.f32 %v1636, %v1800
      %v1833 = vadd.f32 %v1637, %v1801
      %v1834 = vadd.f32 %v1638, %v1802
      %v1835 = vadd.f32 %v1639, %v1803
      %v1836 = vadd.f32 %v1640, %v1804
      %v1837 = vadd.f32 %v1641, %v1805
      %v1838 = vadd.f32 %v1642, %v1806
      %v1839 = vadd.f32 %v1643, %v1807
      %v1840 = vadd.f32 %v1644, %v1808
      %v1841 = vadd.f32 %v1645, %v1809
      %v1842 = vadd.f32 %v1646, %v1810
      %v1843 = vadd.f32 %v1647, %v1811
      %1844 = vset.pattern.permute.xlu0 3
      %1845 = vperm.xlu0 %1844, %v1190
      %v1846 = vpop.permute.xlu0 %1845
      %1848 = vset.pattern.permute.xlu0 3
      %1849 = vperm.xlu0 %1848, %v1191
      %v1850 = vpop.permute.xlu0 %1849
      %1852 = vset.pattern.permute.xlu0 3
      %1853 = vperm.xlu0 %1852, %v1192
      %v1854 = vpop.permute.xlu0 %1853
      %1856 = vset.pattern.permute.xlu0 3
      %1857 = vperm.xlu0 %1856, %v1193
      %v1858 = vpop.permute.xlu0 %1857
      %1860 = vset.pattern.permute.xlu0 3
      %1861 = vperm.xlu0 %1860, %v1194
      %v1862 = vpop.permute.xlu0 %1861
      %1864 = vset.pattern.permute.xlu0 3
      %1865 = vperm.xlu0 %1864, %v1195
      %v1866 = vpop.permute.xlu0 %1865
      %1868 = vset.pattern.permute.xlu0 3
      %1869 = vperm.xlu0 %1868, %v1196
      %v1870 = vpop.permute.xlu0 %1869
      %1872 = vset.pattern.permute.xlu0 3
      %1873 = vperm.xlu0 %1872, %v1197
      %v1874 = vpop.permute.xlu0 %1873
      %1876 = vset.pattern.permute.xlu0 3
      %1877 = vperm.xlu0 %1876, %v1198
      %v1878 = vpop.permute.xlu0 %1877
      %1880 = vset.pattern.permute.xlu0 3
      %1881 = vperm.xlu0 %1880, %v1199
      %v1882 = vpop.permute.xlu0 %1881
      %1884 = vset.pattern.permute.xlu0 3
      %1885 = vperm.xlu0 %1884, %v1200
      %v1886 = vpop.permute.xlu0 %1885
      %1888 = vset.pattern.permute.xlu0 3
      %1889 = vperm.xlu0 %1888, %v1201
      %v1890 = vpop.permute.xlu0 %1889
      %1892 = vset.pattern.permute.xlu0 3
      %1893 = vperm.xlu0 %1892, %v1202
      %v1894 = vpop.permute.xlu0 %1893
      %1896 = vset.pattern.permute.xlu0 3
      %1897 = vperm.xlu0 %1896, %v1203
      %v1898 = vpop.permute.xlu0 %1897
      %1900 = vset.pattern.permute.xlu0 3
      %1901 = vperm.xlu0 %1900, %v1204
      %v1902 = vpop.permute.xlu0 %1901
      %1904 = vset.pattern.permute.xlu0 3
      %1905 = vperm.xlu0 %1904, %v1205
      %v1906 = vpop.permute.xlu0 %1905
      %1908 = vset.pattern.permute.xlu0 3
      %1909 = vperm.xlu0 %1908, %v1206
      %v1910 = vpop.permute.xlu0 %1909
      %1912 = vset.pattern.permute.xlu0 3
      %1913 = vperm.xlu0 %1912, %v1207
      %v1914 = vpop.permute.xlu0 %1913
      %1916 = vset.pattern.permute.xlu0 3
      %1917 = vperm.xlu0 %1916, %v1208
      %v1918 = vpop.permute.xlu0 %1917
      %1920 = vset.pattern.permute.xlu0 3
      %1921 = vperm.xlu0 %1920, %v1209
      %v1922 = vpop.permute.xlu0 %1921
      %1924 = vset.pattern.permute.xlu0 3
      %1925 = vperm.xlu0 %1924, %v1210
      %v1926 = vpop.permute.xlu0 %1925
      %1928 = vset.pattern.permute.xlu0 3
      %1929 = vperm.xlu0 %1928, %v1211
      %v1930 = vpop.permute.xlu0 %1929
      %1932 = vset.pattern.permute.xlu0 3
      %1933 = vperm.xlu0 %1932, %v1212
      %v1934 = vpop.permute.xlu0 %1933
      %1936 = vset.pattern.permute.xlu0 3
      %1937 = vperm.xlu0 %1936, %v1213
      %v1938 = vpop.permute.xlu0 %1937
      %1940 = vset.pattern.permute.xlu0 3
      %1941 = vperm.xlu0 %1940, %v1214
      %v1942 = vpop.permute.xlu0 %1941
      %1944 = vset.pattern.permute.xlu0 3
      %1945 = vperm.xlu0 %1944, %v1215
      %v1946 = vpop.permute.xlu0 %1945
      %1948 = vset.pattern.permute.xlu0 3
      %1949 = vperm.xlu0 %1948, %v1216
      %v1950 = vpop.permute.xlu0 %1949
      %1952 = vset.pattern.permute.xlu0 3
      %1953 = vperm.xlu0 %1952, %v1217
      %v1954 = vpop.permute.xlu0 %1953
      %1956 = vset.pattern.permute.xlu0 3
      %1957 = vperm.xlu0 %1956, %v1218
      %v1958 = vpop.permute.xlu0 %1957
      %1960 = vset.pattern.permute.xlu0 3
      %1961 = vperm.xlu0 %1960, %v1219
      %v1962 = vpop.permute.xlu0 %1961
      %1964 = vset.pattern.permute.xlu0 3
      %1965 = vperm.xlu0 %1964, %v1220
      %v1966 = vpop.permute.xlu0 %1965
      %1968 = vset.pattern.permute.xlu0 3
      %1969 = vperm.xlu0 %1968, %v1221
      %v1970 = vpop.permute.xlu0 %1969
      %v1972 = vlaneseq
      %v1973 = vshrl.u32 %v1972, 7
      %v1974 = vsub.s32 3, %v1973
      %v1975 = vrot.slane %v1222, %v1974
      %v1976 = vmul.f32 %v1846, %v1975
      %v1977 = vmul.f32 %v1850, %v1975
      %v1978 = vmul.f32 %v1854, %v1975
      %v1979 = vmul.f32 %v1858, %v1975
      %v1980 = vmul.f32 %v1862, %v1975
      %v1981 = vmul.f32 %v1866, %v1975
      %v1982 = vmul.f32 %v1870, %v1975
      %v1983 = vmul.f32 %v1874, %v1975
      %v1984 = vmul.f32 %v1878, %v1975
      %v1985 = vmul.f32 %v1882, %v1975
      %v1986 = vmul.f32 %v1886, %v1975
      %v1987 = vmul.f32 %v1890, %v1975
      %v1988 = vmul.f32 %v1894, %v1975
      %v1989 = vmul.f32 %v1898, %v1975
      %v1990 = vmul.f32 %v1902, %v1975
      %v1991 = vmul.f32 %v1906, %v1975
      %v1992 = vmul.f32 %v1910, %v1975
      %v1993 = vmul.f32 %v1914, %v1975
      %v1994 = vmul.f32 %v1918, %v1975
      %v1995 = vmul.f32 %v1922, %v1975
      %v1996 = vmul.f32 %v1926, %v1975
      %v1997 = vmul.f32 %v1930, %v1975
      %v1998 = vmul.f32 %v1934, %v1975
      %v1999 = vmul.f32 %v1938, %v1975
      %v2000 = vmul.f32 %v1942, %v1975
      %v2001 = vmul.f32 %v1946, %v1975
      %v2002 = vmul.f32 %v1950, %v1975
      %v2003 = vmul.f32 %v1954, %v1975
      %v2004 = vmul.f32 %v1958, %v1975
      %v2005 = vmul.f32 %v1962, %v1975
      %v2006 = vmul.f32 %v1966, %v1975
      %v2007 = vmul.f32 %v1970, %v1975
      %v2008 = vadd.f32 %v1812, %v1976
      %v2009 = vadd.f32 %v1813, %v1977
      %v2010 = vadd.f32 %v1814, %v1978
      %v2011 = vadd.f32 %v1815, %v1979
      %v2012 = vadd.f32 %v1816, %v1980
      %v2013 = vadd.f32 %v1817, %v1981
      %v2014 = vadd.f32 %v1818, %v1982
      %v2015 = vadd.f32 %v1819, %v1983
      %v2016 = vadd.f32 %v1820, %v1984
      %v2017 = vadd.f32 %v1821, %v1985
      %v2018 = vadd.f32 %v1822, %v1986
      %v2019 = vadd.f32 %v1823, %v1987
      %v2020 = vadd.f32 %v1824, %v1988
      %v2021 = vadd.f32 %v1825, %v1989
      %v2022 = vadd.f32 %v1826, %v1990
      %v2023 = vadd.f32 %v1827, %v1991
      %v2024 = vadd.f32 %v1828, %v1992
      %v2025 = vadd.f32 %v1829, %v1993
      %v2026 = vadd.f32 %v1830, %v1994
      %v2027 = vadd.f32 %v1831, %v1995
      %v2028 = vadd.f32 %v1832, %v1996
      %v2029 = vadd.f32 %v1833, %v1997
      %v2030 = vadd.f32 %v1834, %v1998
      %v2031 = vadd.f32 %v1835, %v1999
      %v2032 = vadd.f32 %v1836, %v2000
      %v2033 = vadd.f32 %v1837, %v2001
      %v2034 = vadd.f32 %v1838, %v2002
      %v2035 = vadd.f32 %v1839, %v2003
      %v2036 = vadd.f32 %v1840, %v2004
      %v2037 = vadd.f32 %v1841, %v2005
      %v2038 = vadd.f32 %v1842, %v2006
      %v2039 = vadd.f32 %v1843, %v2007
      %v2041 = vlaneseq
      %v2042 = vshrl.u32 %v2041, 7
      %v2043 = vsub.s32 0, %v2042
      %v2044 = vrot.slane %v1223, %v2043
      %v2046 = vadd.f32 %v2008, %v2044
      %v2047 = vadd.f32 %v2009, %v2044
      %v2048 = vadd.f32 %v2010, %v2044
      %v2049 = vadd.f32 %v2011, %v2044
      %v2050 = vadd.f32 %v2012, %v2044
      %v2051 = vadd.f32 %v2013, %v2044
      %v2052 = vadd.f32 %v2014, %v2044
      %v2053 = vadd.f32 %v2015, %v2044
      %v2054 = vadd.f32 %v2016, %v2044
      %v2055 = vadd.f32 %v2017, %v2044
      %v2056 = vadd.f32 %v2018, %v2044
      %v2057 = vadd.f32 %v2019, %v2044
      %v2058 = vadd.f32 %v2020, %v2044
      %v2059 = vadd.f32 %v2021, %v2044
      %v2060 = vadd.f32 %v2022, %v2044
      %v2061 = vadd.f32 %v2023, %v2044
      %v2062 = vadd.f32 %v2024, %v2044
      %v2063 = vadd.f32 %v2025, %v2044
      %v2064 = vadd.f32 %v2026, %v2044
      %v2065 = vadd.f32 %v2027, %v2044
      %v2066 = vadd.f32 %v2028, %v2044
      %v2067 = vadd.f32 %v2029, %v2044
      %v2068 = vadd.f32 %v2030, %v2044
      %v2069 = vadd.f32 %v2031, %v2044
      %v2070 = vadd.f32 %v2032, %v2044
      %v2071 = vadd.f32 %v2033, %v2044
      %v2072 = vadd.f32 %v2034, %v2044
      %v2073 = vadd.f32 %v2035, %v2044
      %v2074 = vadd.f32 %v2036, %v2044
      %v2075 = vadd.f32 %v2037, %v2044
      %v2076 = vadd.f32 %v2038, %v2044
      %v2077 = vadd.f32 %v2039, %v2044
      %v2078 = vmax.f32 %v2046, 0.0
      %v2079 = vmax.f32 %v2047, 0.0
      %v2080 = vmax.f32 %v2048, 0.0
      %v2081 = vmax.f32 %v2049, 0.0
      %v2082 = vmax.f32 %v2050, 0.0
      %v2083 = vmax.f32 %v2051, 0.0
      %v2084 = vmax.f32 %v2052, 0.0
      %v2085 = vmax.f32 %v2053, 0.0
      %v2086 = vmax.f32 %v2054, 0.0
      %v2087 = vmax.f32 %v2055, 0.0
      %v2088 = vmax.f32 %v2056, 0.0
      %v2089 = vmax.f32 %v2057, 0.0
      %v2090 = vmax.f32 %v2058, 0.0
      %v2091 = vmax.f32 %v2059, 0.0
      %v2092 = vmax.f32 %v2060, 0.0
      %v2093 = vmax.f32 %v2061, 0.0
      %v2094 = vmax.f32 %v2062, 0.0
      %v2095 = vmax.f32 %v2063, 0.0
      %v2096 = vmax.f32 %v2064, 0.0
      %v2097 = vmax.f32 %v2065, 0.0
      %v2098 = vmax.f32 %v2066, 0.0
      %v2099 = vmax.f32 %v2067, 0.0
      %v2100 = vmax.f32 %v2068, 0.0
      %v2101 = vmax.f32 %v2069, 0.0
      %v2102 = vmax.f32 %v2070, 0.0
      %v2103 = vmax.f32 %v2071, 0.0
      %v2104 = vmax.f32 %v2072, 0.0
      %v2105 = vmax.f32 %v2073, 0.0
      %v2106 = vmax.f32 %v2074, 0.0
      %v2107 = vmax.f32 %v2075, 0.0
      %v2108 = vmax.f32 %v2076, 0.0
      %v2109 = vmax.f32 %v2077, 0.0
      %vm2110 = vcmask 64512
      %2111 = vst.msk [vmem:[%s197] sm:$0xff] %vm2110, %v2078
      %2112 = vst.msk [vmem:[%s197 + $0x8] sm:$0xff] %vm2110, %v2079
      %2113 = vst.msk [vmem:[%s197 + $0x10] sm:$0xff] %vm2110, %v2080
      %2114 = vst.msk [vmem:[%s197 + $0x18] sm:$0xff] %vm2110, %v2081
      %2115 = vst.msk [vmem:[%s197 + $0x20] sm:$0xff] %vm2110, %v2082
      %2116 = vst.msk [vmem:[%s197 + $0x28] sm:$0xff] %vm2110, %v2083
      %2117 = vst.msk [vmem:[%s197 + $0x30] sm:$0xff] %vm2110, %v2084
      %2118 = vst.msk [vmem:[%s197 + $0x38] sm:$0xff] %vm2110, %v2085
      %2119 = vst.msk [vmem:[%s197 + $0x40] sm:$0xff] %vm2110, %v2086
      %2120 = vst.msk [vmem:[%s197 + $0x48] sm:$0xff] %vm2110, %v2087
      %2121 = vst.msk [vmem:[%s197 + $0x50] sm:$0xff] %vm2110, %v2088
      %2122 = vst.msk [vmem:[%s197 + $0x58] sm:$0xff] %vm2110, %v2089
      %2123 = vst.msk [vmem:[%s197 + $0x60] sm:$0xff] %vm2110, %v2090
      %2124 = vst.msk [vmem:[%s197 + $0x68] sm:$0xff] %vm2110, %v2091
      %2125 = vst.msk [vmem:[%s197 + $0x70] sm:$0xff] %vm2110, %v2092
      %2126 = vst.msk [vmem:[%s197 + $0x78] sm:$0xff] %vm2110, %v2093
      %2127 = vst.msk [vmem:[%s197 + $0x80] sm:$0xff] %vm2110, %v2094
      %2128 = vst.msk [vmem:[%s197 + $0x88] sm:$0xff] %vm2110, %v2095
      %2129 = vst.msk [vmem:[%s197 + $0x90] sm:$0xff] %vm2110, %v2096
      %2130 = vst.msk [vmem:[%s197 + $0x98] sm:$0xff] %vm2110, %v2097
      %2131 = vst.msk [vmem:[%s197 + $0xa0] sm:$0xff] %vm2110, %v2098
      %2132 = vst.msk [vmem:[%s197 + $0xa8] sm:$0xff] %vm2110, %v2099
      %2133 = vst.msk [vmem:[%s197 + $0xb0] sm:$0xff] %vm2110, %v2100
      %2134 = vst.msk [vmem:[%s197 + $0xb8] sm:$0xff] %vm2110, %v2101
      %2135 = vst.msk [vmem:[%s197 + $0xc0] sm:$0xff] %vm2110, %v2102
      %2136 = vst.msk [vmem:[%s197 + $0xc8] sm:$0xff] %vm2110, %v2103
      %2137 = vst.msk [vmem:[%s197 + $0xd0] sm:$0xff] %vm2110, %v2104
      %2138 = vst.msk [vmem:[%s197 + $0xd8] sm:$0xff] %vm2110, %v2105
      %2139 = vst.msk [vmem:[%s197 + $0xe0] sm:$0xff] %vm2110, %v2106
      %2140 = vst.msk [vmem:[%s197 + $0xe8] sm:$0xff] %vm2110, %v2107
      %2141 = vst.msk [vmem:[%s197 + $0xf0] sm:$0xff] %vm2110, %v2108
      %2142 = vst.msk [vmem:[%s197 + $0xf8] sm:$0xff] %vm2110, %v2109
      %p2143 = scmp.lt.s32.totalorder %s15, 1
      %s2144 = scalar_select %p2143, %s15, 1
      %s2145 = smul.addr %s2144, 32
      %s2146 = smul.addr %s2145, 8
      %s2147 = scalar_lea.vmem %s4, %s2146
      // Predicated region
      $region37: #{tpu_custom_call.1} parent=35 // pred_check
        %p2148 = pneg %p122
      $region38: #{tpu_custom_call.1} parent=35 // pred_check_branch
        %2150 = sbr.rel (%p2148) target = $region40
      $region39: #{tpu_custom_call.1} parent=35 // pred_region
        _
      $region40: #{tpu_custom_call.1} parent=35 // pred_fallthru
        _
    $region36: #{tpu_custom_call.1} parent=5 // pred_fallthru
      _
    %p2151 = scmp.le.s32.totalorder 2, %s10
    // Predicated region
    $region41: #{tpu_custom_call.1} parent=5 // pred_check
      %p2152 = pneg %p2151
    $region42: #{tpu_custom_call.1} parent=5 // pred_check_branch
      %2154 = sbr.rel (%p2152) target = $region44
    $region43: #{tpu_custom_call.1} parent=5 // pred_region
      %s2155 = ssub.s32 %s10, 2
      // Predicated region
      $region45: #{tpu_custom_call.1} parent=43 // pred_check
        %p2156 = pneg %p128
      $region46: #{tpu_custom_call.1} parent=43 // pred_check_branch
        %2158 = sbr.rel (%p2156) target = $region48
      $region47: #{tpu_custom_call.1} parent=43 // pred_region
        %p2159 = scmp.lt.s32.totalorder %s16, 1
        %s2160 = scalar_select %p2159, %s16, 1
        %s2161 = smul.addr %s2160, 32
        %s2162 = smul.addr %s2161, 8
        %s2163 = scalar_lea.vmem %s4, %s2162
      $region48: #{tpu_custom_call.1} parent=43 // pred_fallthru
        _
    $region44: #{tpu_custom_call.1} parent=5 // pred_fallthru
      _
  $region6: #{tpu_custom_call.1} parent=0 // loop_footer
    %s14 = sadd.s32 1, %s10
  $region7: #{tpu_custom_call.1} parent=0 // loop_footer_branch
    %9 = sbr.rel target = $region3
  $region8: #{tpu_custom_call.1} parent=0 // loop_exit
    _

</llo_original>
